<compile_context>
chip_gen: v7x
topology: tpu7x:2x2x1
jax: 0.10.0
libtpu: 0.0.40
codegen_flags: <defaults>
</compile_context>

<pallas_src>
import functools

import numpy as np
import jax
import jax.numpy as jnp
from jax.experimental import pallas as pl
from jax.experimental.pallas import tpu as pltpu


def _round_up(x, m):
    return (x + m - 1) // m * m


def _up_kernel(x1_ref, x2_ref, wt_ref, s_ref, bt_ref,
               w1_ref, s1_ref, t1_ref, w2_ref, s2_ref, t2_ref,
               out_ref, xcat_ref, hpad_ref,
               *, NB, C1, C2, Cout, L1, L2, Lseg, pad_left, K):
    Lout = 4 * L1
    Wbuf = NB * Lseg
    Wc = Wbuf - (K - 1)
    f32 = jnp.float32

    # Zero the pad/halo columns.  The interiors are overwritten below every
    # step; the whole (tiny) buffer is cleared so that each grid step is fully
    # independent, which keeps "parallel" dimension semantics (megacore
    # sharding) safe.  Cost is negligible next to the matmuls.
    xcat_ref[...] = jnp.zeros_like(xcat_ref)
    hpad_ref[...] = jnp.zeros_like(hpad_ref)

    x1 = x1_ref[...]                       # (C1, NB*L1)  batch in lanes
    x2 = x2_ref[...]                       # (C1, NB*L2)

    # ---- ConvTranspose1d(C1 -> C1, k=4, s=4) + F.pad + channel concat ----
    # Per batch segment: 4 tap matmuls (MXU) then a 0/1 scatter matmul that
    # drops tap k at output positions 4*l + k.  Result is written (with the
    # diffY//2 left pad) into the second channel half of the concat buffer.
    for n in range(NB):
        x1n = x1[:, n * L1:(n + 1) * L1]                               # (C1, L1)
        up = jnp.zeros((C1, Lout), f32)
        for k in range(4):
            yk = jnp.dot(wt_ref[k], x1n, preferred_element_type=f32)   # (C1, L1)
            up = up + jnp.dot(yk, s_ref[k], preferred_element_type=f32)  # (C1, Lout)
        up = up + bt_ref[...]
        base = n * Lseg + 3                                            # 3 = conv halo
        xcat_ref[0:C1, base:base + L2] = (
            x2[:, n * L2:(n + 1) * L2].astype(xcat_ref.dtype))
        xcat_ref[C1:C2, base + pad_left:base + pad_left + Lout] = (
            up.astype(xcat_ref.dtype))

    # ---- Conv1d(C2 -> Cout, k=7, pad=3) -> BN(eval) -> ReLU ----
    # Single im2col matmul: contraction K*C2p instead of 7 tiny matmuls.
    xcat = xcat_ref[...]                                               # (C2p, Wbuf)
    im1 = jnp.concatenate([xcat[:, k:k + Wc] for k in range(K)], axis=0)
    h = jnp.dot(w1_ref[...], im1.astype(w1_ref.dtype), preferred_element_type=f32)
    h = jnp.maximum(h * s1_ref[...] + t1_ref[...], 0.0)                # (Cout, Wc)

    # Re-pad: valid outputs for segment n live at columns [n*Lseg, n*Lseg+L2);
    # put them back at [n*Lseg+3, ...) with zero halos for the second conv.
    for n in range(NB):
        hpad_ref[0:Cout, n * Lseg + 3:n * Lseg + 3 + L2] = h[:, n * Lseg:n * Lseg + L2]

    # ---- Conv1d(Cout -> Cout, k=7, pad=3) -> BN(eval) -> ReLU ----
    hpad = hpad_ref[...]                                               # (Coutp, Wbuf)
    im2 = jnp.concatenate([hpad[:, k:k + Wc] for k in range(K)], axis=0)
    y = jnp.dot(w2_ref[...], im2.astype(w2_ref.dtype), preferred_element_type=f32)
    y = jnp.maximum(y * s2_ref[...] + t2_ref[...], 0.0)                # (Cout, Wc)

    # Extract per-segment interiors into the batch-in-lanes output block.
    for n in range(NB):
        out_ref[:, n * L2:(n + 1) * L2] = (
            y[:, n * Lseg:n * Lseg + L2].astype(out_ref.dtype))


def _fold_bn(gamma, beta, mean, var, eps=1e-5):
    scale = gamma / jnp.sqrt(var + eps)
    shift = beta - mean * scale
    return scale.reshape(-1, 1), shift.reshape(-1, 1)


def _pick_block(n, limit=8):
    nb = 1
    for d in range(1, min(n, limit) + 1):
        if n % d == 0:
            nb = d
    return nb


def up_forward(x1, x2, params, *, nb=None, compute_dtype=jnp.float32):
    """x1: (N, C1, L1), x2: (N, C1, L2) -> (N, Cout, L2).  BN in eval mode."""
    N, C1, L1 = x1.shape
    N2, C1b, L2 = x2.shape
    assert N2 == N and C1b == C1
    K = 7
    Lout = 4 * L1
    diffY = L2 - Lout
    assert diffY >= 0, "x2 must be at least as long as the upsampled x1"
    pad_left = diffY // 2
    Cout = params["w1"].shape[1]
    C2 = 2 * C1

    NB = nb if nb is not None else _pick_block(N)
    assert N % NB == 0
    G = N // NB
    Lseg = _round_up(L2 + (K - 1), 128)      # lane-aligned per-batch segment
    Wbuf = NB * Lseg
    C2p = _round_up(C2, 8)                   # sublane-aligned channel dims
    Coutp = _round_up(Cout, 8)

    # ---- host-side layout plumbing: stack NB batch elements into lanes ----
    x1_l = x1.reshape(G, NB, C1, L1).transpose(0, 2, 1, 3).reshape(G, C1, NB * L1)
    x2_l = x2.reshape(G, NB, C1, L2).transpose(0, 2, 1, 3).reshape(G, C1, NB * L2)
    x1_l = x1_l.astype(compute_dtype)
    x2_l = x2_l.astype(compute_dtype)

    # Transposed-conv weights, one (C1out, C1in) matrix per tap.
    wt_taps = jnp.transpose(params["wt"], (2, 1, 0)).astype(compute_dtype)   # (4, C1, C1)
    # 0/1 scatter matrices: S[k, l, 4l+k] = 1  (O(L1*Lout), no Wsel blowup).
    l_idx = jnp.arange(L1)[:, None]
    p_idx = jnp.arange(Lout)[None, :]
    S = jnp.stack([(p_idx == 4 * l_idx + k) for k in range(4)],
                  axis=0).astype(jnp.float32)
    bt = params["bt"].reshape(C1, 1).astype(jnp.float32)

    # im2col conv weights (channel dim padded to a multiple of 8 sublanes).
    def prep_conv(w, cin, cinp):
        wt = jnp.transpose(w, (1, 0, 2))                       # (Cout, K, Cin)
        wt = jnp.pad(wt, ((0, 0), (0, 0), (0, cinp - cin)))
        return wt.reshape(Cout, K * cinp).astype(compute_dtype)

    w1i = prep_conv(params["w1"], C2, C2p)
    w2i = prep_conv(params["w2"], Cout, Coutp)
    # Conv bias folded into the BN shift: (conv + b)*s + t == conv*s + (b*s + t).
    s1, t1 = _fold_bn(*params["bn1"])
    s2, t2 = _fold_bn(*params["bn2"])
    t1 = t1 + params["b1"].reshape(-1, 1) * s1
    t2 = t2 + params["b2"].reshape(-1, 1) * s2

    kernel = functools.partial(_up_kernel, NB=NB, C1=C1, C2=C2, Cout=Cout,
                               L1=L1, L2=L2, Lseg=Lseg, pad_left=pad_left, K=K)

    def full_spec(shape):
        return pl.BlockSpec(shape, lambda g, _nd=len(shape): (0,) * _nd)

    in_specs = [
        pl.BlockSpec((None, C1, NB * L1), lambda g: (g, 0, 0)),   # x1 (batch in lanes)
        pl.BlockSpec((None, C1, NB * L2), lambda g: (g, 0, 0)),   # x2 (batch in lanes)
        full_spec((4, C1, C1)),                                   # wt_taps
        full_spec((4, L1, Lout)),                                 # scatter matrices
        full_spec((C1, 1)),                                       # bt
        full_spec((Cout, K * C2p)),                               # w1 (im2col layout)
        full_spec((Cout, 1)), full_spec((Cout, 1)),               # s1, t1 (bias folded)
        full_spec((Cout, K * Coutp)),                             # w2 (im2col layout)
        full_spec((Cout, 1)), full_spec((Cout, 1)),               # s2, t2 (bias folded)
    ]
    out_specs = pl.BlockSpec((None, Cout, NB * L2), lambda g: (g, 0, 0))

    out_l = pl.pallas_call(
        kernel,
        out_shape=jax.ShapeDtypeStruct((G, Cout, NB * L2), jnp.float32),
        grid=(G,),
        in_specs=in_specs,
        out_specs=out_specs,
        scratch_shapes=[
            pltpu.VMEM((C2p, Wbuf), jnp.float32),     # padded concat buffer
            pltpu.VMEM((Coutp, Wbuf), jnp.float32),   # padded hidden buffer
        ],
        compiler_params=pltpu.CompilerParams(dimension_semantics=("parallel",)),
    )(x1_l, x2_l, wt_taps, S, bt, w1i, s1, t1, w2i, s2, t2)

    # Undo the batch-in-lanes packing.
    return out_l.reshape(G, Cout, NB, L2).transpose(0, 2, 1, 3).reshape(N, Cout, L2)


def init_params(key, in_channels, out_channels):
    C1 = in_channels // 2
    K = 7
    ks = jax.random.split(key, 14)
    params = {
        # ConvTranspose1d weight layout: (in_channels, out_channels, kernel=4)
        "wt": 0.1 * jax.random.normal(ks[0], (C1, C1, 4), jnp.float32),
        "bt": 0.1 * jax.random.normal(ks[1], (C1,), jnp.float32),
        # Conv1d weights stored as (K, Cout, Cin)
        "w1": 0.1 * jax.random.normal(ks[2], (K, out_channels, in_channels), jnp.float32),
        "b1": 0.1 * jax.random.normal(ks[3], (out_channels,), jnp.float32),
        "w2": 0.1 * jax.random.normal(ks[4], (K, out_channels, out_channels), jnp.float32),
        "b2": 0.1 * jax.random.normal(ks[5], (out_channels,), jnp.float32),
        # BN params: (gamma, beta, running_mean, running_var)
        "bn1": (1.0 + 0.1 * jax.random.normal(ks[6], (out_channels,), jnp.float32),
                0.1 * jax.random.normal(ks[7], (out_channels,), jnp.float32),
                0.1 * jax.random.normal(ks[8], (out_channels,), jnp.float32),
                0.5 + jax.random.uniform(ks[9], (out_channels,), jnp.float32)),
        "bn2": (1.0 + 0.1 * jax.random.normal(ks[10], (out_channels,), jnp.float32),
                0.1 * jax.random.normal(ks[11], (out_channels,), jnp.float32),
                0.1 * jax.random.normal(ks[12], (out_channels,), jnp.float32),
                0.5 + jax.random.uniform(ks[13], (out_channels,), jnp.float32)),
    }
    return params


def ref_forward(x1, x2, params):
    """Pure-JAX reference mirroring the PyTorch module (BN in eval mode)."""
    N, C1, L1 = x1.shape
    L2 = x2.shape[2]
    Wt, bt = params["wt"], params["bt"]
    # ConvTranspose1d stride=4, k=4: out[n, o, 4l+k] = sum_c x1[n,c,l] * Wt[c,o,k] + bt[o]
    y = jnp.einsum("ncl,cok->nolk", x1, Wt).reshape(N, C1, L1 * 4) + bt[None, :, None]
    diffY = L2 - y.shape[2]
    y = jnp.pad(y, ((0, 0), (0, 0), (diffY // 2, diffY - diffY // 2)))
    x = jnp.concatenate([x2, y], axis=1)

    def conv_bn_relu(x, W, b, bn):
        K = W.shape[0]
        L = x.shape[2]
        xp = jnp.pad(x, ((0, 0), (0, 0), (3, 3)))
        out = jnp.zeros((x.shape[0], W.shape[1], L), jnp.float32)
        for k in range(K):
            out = out + jnp.einsum("ncl,oc->nol", xp[:, :, k:k + L], W[k])
        out = out + b[None, :, None]
        gamma, beta, mean, var = bn
        out = (out - mean[None, :, None]) / jnp.sqrt(var[None, :, None] + 1e-5)
        out = out * gamma[None, :, None] + beta[None, :, None]
        return jnp.maximum(out, 0.0)

    h = conv_bn_relu(x, params["w1"], params["b1"], params["bn1"])
    return conv_bn_relu(h, params["w2"], params["b2"], params["bn2"])


if __name__ == "__main__":
    key = jax.random.PRNGKey(0)
    in_channels, out_channels = 8, 4
    C1 = in_channels // 2
    N, L1, L2 = 4, 16, 68          # upsampled length = 64, diffY = 4 -> pad (2, 2)

    k1, k2, kp = jax.random.split(key, 3)
    x1 = jax.random.normal(k1, (N, C1, L1), jnp.float32)
    x2 = jax.random.normal(k2, (N, C1, L2), jnp.float32)
    params = init_params(kp, in_channels, out_channels)

    # nb=2 -> grid of 2 batch blocks, 2 examples per block (batch packed in lanes).
    out = up_forward(x1, x2, params, nb=2)
    out = jax.block_until_ready(out)

    ref = ref_forward(x1, x2, params)
    assert out.shape == (N, out_channels, L2)
    np.testing.assert_allclose(np.asarray(out), np.asarray(ref), rtol=1e-3, atol=1e-3)
    print("KERNEL_OK")
</pallas_src>

<mosaic_0001>
module attributes {stable_mosaic.version = 11 : i64} {
  func.func @_up_kernel(%arg0: i32, %arg1: memref<1x4x32xf32, #tpu.memory_space<vmem>>, %arg2: memref<1x4x136xf32, #tpu.memory_space<vmem>>, %arg3: memref<4x4x4xf32, #tpu.memory_space<vmem>>, %arg4: memref<4x16x64xf32, #tpu.memory_space<vmem>>, %arg5: memref<4x1xf32, #tpu.memory_space<vmem>>, %arg6: memref<4x56xf32, #tpu.memory_space<vmem>>, %arg7: memref<4x1xf32, #tpu.memory_space<vmem>>, %arg8: memref<4x1xf32, #tpu.memory_space<vmem>>, %arg9: memref<4x56xf32, #tpu.memory_space<vmem>>, %arg10: memref<4x1xf32, #tpu.memory_space<vmem>>, %arg11: memref<4x1xf32, #tpu.memory_space<vmem>>, %arg12: memref<1x4x136xf32, #tpu.memory_space<vmem>>, %arg13: memref<8x256xf32, #tpu.memory_space<vmem>>, %arg14: memref<8x256xf32, #tpu.memory_space<vmem>>) attributes {dimension_semantics = [#tpu.dimension_semantics<parallel>], iteration_bounds = array<i64: 2>, scalar_prefetch = 0 : i64, scratch_operands = 2 : i64, tpu.core_type = #tpu.core_type<tc>, window_params = [{transform_indices = @transform_0, window_bounds = array<i64: 1, 4, 32>}, {transform_indices = @transform_1, window_bounds = array<i64: 1, 4, 136>}, {pipeline_mode = #tpu.pipeline_mode<synchronous>, transform_indices = @transform_2, window_bounds = array<i64: 4, 4, 4>}, {pipeline_mode = #tpu.pipeline_mode<synchronous>, transform_indices = @transform_3, window_bounds = array<i64: 4, 16, 64>}, {pipeline_mode = #tpu.pipeline_mode<synchronous>, transform_indices = @transform_4, window_bounds = array<i64: 4, 1>}, {pipeline_mode = #tpu.pipeline_mode<synchronous>, transform_indices = @transform_5, window_bounds = array<i64: 4, 56>}, {pipeline_mode = #tpu.pipeline_mode<synchronous>, transform_indices = @transform_6, window_bounds = array<i64: 4, 1>}, {pipeline_mode = #tpu.pipeline_mode<synchronous>, transform_indices = @transform_7, window_bounds = array<i64: 4, 1>}, {pipeline_mode = #tpu.pipeline_mode<synchronous>, transform_indices = @transform_8, window_bounds = array<i64: 4, 56>}, {pipeline_mode = #tpu.pipeline_mode<synchronous>, transform_indices = @transform_9, window_bounds = array<i64: 4, 1>}, {pipeline_mode = #tpu.pipeline_mode<synchronous>, transform_indices = @transform_10, window_bounds = array<i64: 4, 1>}, {transform_indices = @transform_11, window_bounds = array<i64: 1, 4, 136>}]} {
    %cst = arith.constant 0.000000e+00 : f32
    %0 = vector.broadcast %cst : f32 to vector<8x256xf32>
    %c0 = arith.constant 0 : index
    %c0_0 = arith.constant 0 : index
    %1 = vector.load %arg13[%c0, %c0_0] : memref<8x256xf32, #tpu.memory_space<vmem>>, vector<8x256xf32>
    tpu.vector_store %arg13[%c0, %c0_0], %0 {strides = array<i32>} : memref<8x256xf32, #tpu.memory_space<vmem>>, vector<8x256xf32>,
    %cst_1 = arith.constant 0.000000e+00 : f32
    %2 = vector.broadcast %cst_1 : f32 to vector<8x256xf32>
    %c0_2 = arith.constant 0 : index
    %c0_3 = arith.constant 0 : index
    %3 = vector.load %arg14[%c0_2, %c0_3] : memref<8x256xf32, #tpu.memory_space<vmem>>, vector<8x256xf32>
    tpu.vector_store %arg14[%c0_2, %c0_3], %2 {strides = array<i32>} : memref<8x256xf32, #tpu.memory_space<vmem>>, vector<8x256xf32>,
    %c0_4 = arith.constant 0 : index
    %c0_5 = arith.constant 0 : index
    %c0_6 = arith.constant 0 : index
    %4 = vector.load %arg1[%c0_4, %c0_5, %c0_6] : memref<1x4x32xf32, #tpu.memory_space<vmem>>, vector<1x4x32xf32>
    %5 = vector.shape_cast %4 : vector<1x4x32xf32> to vector<4x32xf32>
    %c0_7 = arith.constant 0 : index
    %c0_8 = arith.constant 0 : index
    %c0_9 = arith.constant 0 : index
    %6 = vector.load %arg2[%c0_7, %c0_8, %c0_9] : memref<1x4x136xf32, #tpu.memory_space<vmem>>, vector<1x4x136xf32>
    %7 = vector.shape_cast %6 : vector<1x4x136xf32> to vector<4x136xf32>
    %8 = vector.extract_strided_slice %5 {offsets = [0, 0], sizes = [4, 16], strides = [1, 1]} : vector<4x32xf32> to vector<4x16xf32>
    %cst_10 = arith.constant 0.000000e+00 : f32
    %9 = vector.broadcast %cst_10 : f32 to vector<4x64xf32>
    %c0_11 = arith.constant 0 : index
    %c0_12 = arith.constant 0 : index
    %c0_13 = arith.constant 0 : index
    %10 = vector.load %arg3[%c0_11, %c0_12, %c0_13] : memref<4x4x4xf32, #tpu.memory_space<vmem>>, vector<1x4x4xf32>
    %11 = vector.shape_cast %10 : vector<1x4x4xf32> to vector<4x4xf32>
    %cst_14 = arith.constant dense<0.000000e+00> : vector<4x16xf32>
    %12 = tpu.matmul %11, %8, %cst_14 {dimension_numbers = #tpu.dot_dimension_numbers<[1], [0], [0], [1], [0, 0, 1, 1], [], []>} : vector<4x4xf32>, vector<4x16xf32>, vector<4x16xf32> -> vector<4x16xf32>
    %c0_15 = arith.constant 0 : index
    %c0_16 = arith.constant 0 : index
    %c0_17 = arith.constant 0 : index
    %13 = vector.load %arg4[%c0_15, %c0_16, %c0_17] : memref<4x16x64xf32, #tpu.memory_space<vmem>>, vector<1x16x64xf32>
    %14 = vector.shape_cast %13 : vector<1x16x64xf32> to vector<16x64xf32>
    %cst_18 = arith.constant dense<0.000000e+00> : vector<4x64xf32>
    %15 = tpu.matmul %12, %14, %cst_18 {dimension_numbers = #tpu.dot_dimension_numbers<[1], [0], [0], [1], [0, 0, 1, 1], [], []>} : vector<4x16xf32>, vector<16x64xf32>, vector<4x64xf32> -> vector<4x64xf32>
    %16 = arith.addf %9, %15 : vector<4x64xf32>
    %c1 = arith.constant 1 : index
    %c0_19 = arith.constant 0 : index
    %c0_20 = arith.constant 0 : index
    %17 = vector.load %arg3[%c1, %c0_19, %c0_20] : memref<4x4x4xf32, #tpu.memory_space<vmem>>, vector<1x4x4xf32>
    %18 = vector.shape_cast %17 : vector<1x4x4xf32> to vector<4x4xf32>
    %cst_21 = arith.constant dense<0.000000e+00> : vector<4x16xf32>
    %19 = tpu.matmul %18, %8, %cst_21 {dimension_numbers = #tpu.dot_dimension_numbers<[1], [0], [0], [1], [0, 0, 1, 1], [], []>} : vector<4x4xf32>, vector<4x16xf32>, vector<4x16xf32> -> vector<4x16xf32>
    %c1_22 = arith.constant 1 : index
    %c0_23 = arith.constant 0 : index
    %c0_24 = arith.constant 0 : index
    %20 = vector.load %arg4[%c1_22, %c0_23, %c0_24] : memref<4x16x64xf32, #tpu.memory_space<vmem>>, vector<1x16x64xf32>
    %21 = vector.shape_cast %20 : vector<1x16x64xf32> to vector<16x64xf32>
    %cst_25 = arith.constant dense<0.000000e+00> : vector<4x64xf32>
    %22 = tpu.matmul %19, %21, %cst_25 {dimension_numbers = #tpu.dot_dimension_numbers<[1], [0], [0], [1], [0, 0, 1, 1], [], []>} : vector<4x16xf32>, vector<16x64xf32>, vector<4x64xf32> -> vector<4x64xf32>
    %23 = arith.addf %16, %22 : vector<4x64xf32>
    %c2 = arith.constant 2 : index
    %c0_26 = arith.constant 0 : index
    %c0_27 = arith.constant 0 : index
    %24 = vector.load %arg3[%c2, %c0_26, %c0_27] : memref<4x4x4xf32, #tpu.memory_space<vmem>>, vector<1x4x4xf32>
    %25 = vector.shape_cast %24 : vector<1x4x4xf32> to vector<4x4xf32>
    %cst_28 = arith.constant dense<0.000000e+00> : vector<4x16xf32>
    %26 = tpu.matmul %25, %8, %cst_28 {dimension_numbers = #tpu.dot_dimension_numbers<[1], [0], [0], [1], [0, 0, 1, 1], [], []>} : vector<4x4xf32>, vector<4x16xf32>, vector<4x16xf32> -> vector<4x16xf32>
    %c2_29 = arith.constant 2 : index
    %c0_30 = arith.constant 0 : index
    %c0_31 = arith.constant 0 : index
    %27 = vector.load %arg4[%c2_29, %c0_30, %c0_31] : memref<4x16x64xf32, #tpu.memory_space<vmem>>, vector<1x16x64xf32>
    %28 = vector.shape_cast %27 : vector<1x16x64xf32> to vector<16x64xf32>
    %cst_32 = arith.constant dense<0.000000e+00> : vector<4x64xf32>
    %29 = tpu.matmul %26, %28, %cst_32 {dimension_numbers = #tpu.dot_dimension_numbers<[1], [0], [0], [1], [0, 0, 1, 1], [], []>} : vector<4x16xf32>, vector<16x64xf32>, vector<4x64xf32> -> vector<4x64xf32>
    %30 = arith.addf %23, %29 : vector<4x64xf32>
    %c3 = arith.constant 3 : index
    %c0_33 = arith.constant 0 : index
    %c0_34 = arith.constant 0 : index
    %31 = vector.load %arg3[%c3, %c0_33, %c0_34] : memref<4x4x4xf32, #tpu.memory_space<vmem>>, vector<1x4x4xf32>
    %32 = vector.shape_cast %31 : vector<1x4x4xf32> to vector<4x4xf32>
    %cst_35 = arith.constant dense<0.000000e+00> : vector<4x16xf32>
    %33 = tpu.matmul %32, %8, %cst_35 {dimension_numbers = #tpu.dot_dimension_numbers<[1], [0], [0], [1], [0, 0, 1, 1], [], []>} : vector<4x4xf32>, vector<4x16xf32>, vector<4x16xf32> -> vector<4x16xf32>
    %c3_36 = arith.constant 3 : index
    %c0_37 = arith.constant 0 : index
    %c0_38 = arith.constant 0 : index
    %34 = vector.load %arg4[%c3_36, %c0_37, %c0_38] : memref<4x16x64xf32, #tpu.memory_space<vmem>>, vector<1x16x64xf32>
    %35 = vector.shape_cast %34 : vector<1x16x64xf32> to vector<16x64xf32>
    %cst_39 = arith.constant dense<0.000000e+00> : vector<4x64xf32>
    %36 = tpu.matmul %33, %35, %cst_39 {dimension_numbers = #tpu.dot_dimension_numbers<[1], [0], [0], [1], [0, 0, 1, 1], [], []>} : vector<4x16xf32>, vector<16x64xf32>, vector<4x64xf32> -> vector<4x64xf32>
    %37 = arith.addf %30, %36 : vector<4x64xf32>
    %c0_40 = arith.constant 0 : index
    %c0_41 = arith.constant 0 : index
    %38 = vector.load %arg5[%c0_40, %c0_41] : memref<4x1xf32, #tpu.memory_space<vmem>>, vector<4x1xf32>
    %39 = vector.broadcast %38 : vector<4x1xf32> to vector<4x64xf32>
    %40 = arith.addf %37, %39 : vector<4x64xf32>
    %41 = vector.extract_strided_slice %7 {offsets = [0, 0], sizes = [4, 68], strides = [1, 1]} : vector<4x136xf32> to vector<4x68xf32>
    %c0_42 = arith.constant 0 : index
    %c3_43 = arith.constant 3 : index
    %42 = vector.load %arg13[%c0_42, %c3_43] : memref<8x256xf32, #tpu.memory_space<vmem>>, vector<4x68xf32>
    tpu.vector_store %arg13[%c0_42, %c3_43], %41 {strides = array<i32>} : memref<8x256xf32, #tpu.memory_space<vmem>>, vector<4x68xf32>,
    %c4 = arith.constant 4 : index
    %c5 = arith.constant 5 : index
    %43 = vector.load %arg13[%c4, %c5] : memref<8x256xf32, #tpu.memory_space<vmem>>, vector<4x64xf32>
    tpu.vector_store %arg13[%c4, %c5], %40 {strides = array<i32>} : memref<8x256xf32, #tpu.memory_space<vmem>>, vector<4x64xf32>,
    %44 = vector.extract_strided_slice %5 {offsets = [0, 16], sizes = [4, 16], strides = [1, 1]} : vector<4x32xf32> to vector<4x16xf32>
    %cst_44 = arith.constant 0.000000e+00 : f32
    %45 = vector.broadcast %cst_44 : f32 to vector<4x64xf32>
    %c0_45 = arith.constant 0 : index
    %c0_46 = arith.constant 0 : index
    %c0_47 = arith.constant 0 : index
    %46 = vector.load %arg3[%c0_45, %c0_46, %c0_47] : memref<4x4x4xf32, #tpu.memory_space<vmem>>, vector<1x4x4xf32>
    %47 = vector.shape_cast %46 : vector<1x4x4xf32> to vector<4x4xf32>
    %cst_48 = arith.constant dense<0.000000e+00> : vector<4x16xf32>
    %48 = tpu.matmul %47, %44, %cst_48 {dimension_numbers = #tpu.dot_dimension_numbers<[1], [0], [0], [1], [0, 0, 1, 1], [], []>} : vector<4x4xf32>, vector<4x16xf32>, vector<4x16xf32> -> vector<4x16xf32>
    %c0_49 = arith.constant 0 : index
    %c0_50 = arith.constant 0 : index
    %c0_51 = arith.constant 0 : index
    %49 = vector.load %arg4[%c0_49, %c0_50, %c0_51] : memref<4x16x64xf32, #tpu.memory_space<vmem>>, vector<1x16x64xf32>
    %50 = vector.shape_cast %49 : vector<1x16x64xf32> to vector<16x64xf32>
    %cst_52 = arith.constant dense<0.000000e+00> : vector<4x64xf32>
    %51 = tpu.matmul %48, %50, %cst_52 {dimension_numbers = #tpu.dot_dimension_numbers<[1], [0], [0], [1], [0, 0, 1, 1], [], []>} : vector<4x16xf32>, vector<16x64xf32>, vector<4x64xf32> -> vector<4x64xf32>
    %52 = arith.addf %45, %51 : vector<4x64xf32>
    %c1_53 = arith.constant 1 : index
    %c0_54 = arith.constant 0 : index
    %c0_55 = arith.constant 0 : index
    %53 = vector.load %arg3[%c1_53, %c0_54, %c0_55] : memref<4x4x4xf32, #tpu.memory_space<vmem>>, vector<1x4x4xf32>
    %54 = vector.shape_cast %53 : vector<1x4x4xf32> to vector<4x4xf32>
    %cst_56 = arith.constant dense<0.000000e+00> : vector<4x16xf32>
    %55 = tpu.matmul %54, %44, %cst_56 {dimension_numbers = #tpu.dot_dimension_numbers<[1], [0], [0], [1], [0, 0, 1, 1], [], []>} : vector<4x4xf32>, vector<4x16xf32>, vector<4x16xf32> -> vector<4x16xf32>
    %c1_57 = arith.constant 1 : index
    %c0_58 = arith.constant 0 : index
    %c0_59 = arith.constant 0 : index
    %56 = vector.load %arg4[%c1_57, %c0_58, %c0_59] : memref<4x16x64xf32, #tpu.memory_space<vmem>>, vector<1x16x64xf32>
    %57 = vector.shape_cast %56 : vector<1x16x64xf32> to vector<16x64xf32>
    %cst_60 = arith.constant dense<0.000000e+00> : vector<4x64xf32>
    %58 = tpu.matmul %55, %57, %cst_60 {dimension_numbers = #tpu.dot_dimension_numbers<[1], [0], [0], [1], [0, 0, 1, 1], [], []>} : vector<4x16xf32>, vector<16x64xf32>, vector<4x64xf32> -> vector<4x64xf32>
    %59 = arith.addf %52, %58 : vector<4x64xf32>
    %c2_61 = arith.constant 2 : index
    %c0_62 = arith.constant 0 : index
    %c0_63 = arith.constant 0 : index
    %60 = vector.load %arg3[%c2_61, %c0_62, %c0_63] : memref<4x4x4xf32, #tpu.memory_space<vmem>>, vector<1x4x4xf32>
    %61 = vector.shape_cast %60 : vector<1x4x4xf32> to vector<4x4xf32>
    %cst_64 = arith.constant dense<0.000000e+00> : vector<4x16xf32>
    %62 = tpu.matmul %61, %44, %cst_64 {dimension_numbers = #tpu.dot_dimension_numbers<[1], [0], [0], [1], [0, 0, 1, 1], [], []>} : vector<4x4xf32>, vector<4x16xf32>, vector<4x16xf32> -> vector<4x16xf32>
    %c2_65 = arith.constant 2 : index
    %c0_66 = arith.constant 0 : index
    %c0_67 = arith.constant 0 : index
    %63 = vector.load %arg4[%c2_65, %c0_66, %c0_67] : memref<4x16x64xf32, #tpu.memory_space<vmem>>, vector<1x16x64xf32>
    %64 = vector.shape_cast %63 : vector<1x16x64xf32> to vector<16x64xf32>
    %cst_68 = arith.constant dense<0.000000e+00> : vector<4x64xf32>
    %65 = tpu.matmul %62, %64, %cst_68 {dimension_numbers = #tpu.dot_dimension_numbers<[1], [0], [0], [1], [0, 0, 1, 1], [], []>} : vector<4x16xf32>, vector<16x64xf32>, vector<4x64xf32> -> vector<4x64xf32>
    %66 = arith.addf %59, %65 : vector<4x64xf32>
    %c3_69 = arith.constant 3 : index
    %c0_70 = arith.constant 0 : index
    %c0_71 = arith.constant 0 : index
    %67 = vector.load %arg3[%c3_69, %c0_70, %c0_71] : memref<4x4x4xf32, #tpu.memory_space<vmem>>, vector<1x4x4xf32>
    %68 = vector.shape_cast %67 : vector<1x4x4xf32> to vector<4x4xf32>
    %cst_72 = arith.constant dense<0.000000e+00> : vector<4x16xf32>
    %69 = tpu.matmul %68, %44, %cst_72 {dimension_numbers = #tpu.dot_dimension_numbers<[1], [0], [0], [1], [0, 0, 1, 1], [], []>} : vector<4x4xf32>, vector<4x16xf32>, vector<4x16xf32> -> vector<4x16xf32>
    %c3_73 = arith.constant 3 : index
    %c0_74 = arith.constant 0 : index
    %c0_75 = arith.constant 0 : index
    %70 = vector.load %arg4[%c3_73, %c0_74, %c0_75] : memref<4x16x64xf32, #tpu.memory_space<vmem>>, vector<1x16x64xf32>
    %71 = vector.shape_cast %70 : vector<1x16x64xf32> to vector<16x64xf32>
    %cst_76 = arith.constant dense<0.000000e+00> : vector<4x64xf32>
    %72 = tpu.matmul %69, %71, %cst_76 {dimension_numbers = #tpu.dot_dimension_numbers<[1], [0], [0], [1], [0, 0, 1, 1], [], []>} : vector<4x16xf32>, vector<16x64xf32>, vector<4x64xf32> -> vector<4x64xf32>
    %73 = arith.addf %66, %72 : vector<4x64xf32>
    %c0_77 = arith.constant 0 : index
    %c0_78 = arith.constant 0 : index
    %74 = vector.load %arg5[%c0_77, %c0_78] : memref<4x1xf32, #tpu.memory_space<vmem>>, vector<4x1xf32>
    %75 = vector.broadcast %74 : vector<4x1xf32> to vector<4x64xf32>
    %76 = arith.addf %73, %75 : vector<4x64xf32>
    %77 = vector.extract_strided_slice %7 {offsets = [0, 68], sizes = [4, 68], strides = [1, 1]} : vector<4x136xf32> to vector<4x68xf32>
    %c0_79 = arith.constant 0 : index
    %c131 = arith.constant 131 : index
    %78 = vector.load %arg13[%c0_79, %c131] : memref<8x256xf32, #tpu.memory_space<vmem>>, vector<4x68xf32>
    tpu.vector_store %arg13[%c0_79, %c131], %77 {strides = array<i32>} : memref<8x256xf32, #tpu.memory_space<vmem>>, vector<4x68xf32>,
    %c4_80 = arith.constant 4 : index
    %c133 = arith.constant 133 : index
    %79 = vector.load %arg13[%c4_80, %c133] : memref<8x256xf32, #tpu.memory_space<vmem>>, vector<4x64xf32>
    tpu.vector_store %arg13[%c4_80, %c133], %76 {strides = array<i32>} : memref<8x256xf32, #tpu.memory_space<vmem>>, vector<4x64xf32>,
    %c0_81 = arith.constant 0 : index
    %c0_82 = arith.constant 0 : index
    %80 = vector.load %arg13[%c0_81, %c0_82] : memref<8x256xf32, #tpu.memory_space<vmem>>, vector<8x256xf32>
    %81 = vector.extract_strided_slice %80 {offsets = [0, 0], sizes = [8, 250], strides = [1, 1]} : vector<8x256xf32> to vector<8x250xf32>
    %82 = vector.extract_strided_slice %80 {offsets = [0, 1], sizes = [8, 250], strides = [1, 1]} : vector<8x256xf32> to vector<8x250xf32>
    %83 = vector.extract_strided_slice %80 {offsets = [0, 2], sizes = [8, 250], strides = [1, 1]} : vector<8x256xf32> to vector<8x250xf32>
    %84 = vector.extract_strided_slice %80 {offsets = [0, 3], sizes = [8, 250], strides = [1, 1]} : vector<8x256xf32> to vector<8x250xf32>
    %85 = vector.extract_strided_slice %80 {offsets = [0, 4], sizes = [8, 250], strides = [1, 1]} : vector<8x256xf32> to vector<8x250xf32>
    %86 = vector.extract_strided_slice %80 {offsets = [0, 5], sizes = [8, 250], strides = [1, 1]} : vector<8x256xf32> to vector<8x250xf32>
    %87 = vector.extract_strided_slice %80 {offsets = [0, 6], sizes = [8, 250], strides = [1, 1]} : vector<8x256xf32> to vector<8x250xf32>
    %88 = tpu.concatenate %81, %82, %83, %84, %85, %86, %87 in 0 : vector<8x250xf32>, vector<8x250xf32>, vector<8x250xf32>, vector<8x250xf32>, vector<8x250xf32>, vector<8x250xf32>, vector<8x250xf32> -> vector<56x250xf32>
    %c0_83 = arith.constant 0 : index
    %c0_84 = arith.constant 0 : index
    %89 = vector.load %arg6[%c0_83, %c0_84] : memref<4x56xf32, #tpu.memory_space<vmem>>, vector<4x56xf32>
    %cst_85 = arith.constant dense<0.000000e+00> : vector<4x250xf32>
    %90 = tpu.matmul %89, %88, %cst_85 {dimension_numbers = #tpu.dot_dimension_numbers<[1], [0], [0], [1], [0, 0, 1, 1], [], []>} : vector<4x56xf32>, vector<56x250xf32>, vector<4x250xf32> -> vector<4x250xf32>
    %c0_86 = arith.constant 0 : index
    %c0_87 = arith.constant 0 : index
    %91 = vector.load %arg7[%c0_86, %c0_87] : memref<4x1xf32, #tpu.memory_space<vmem>>, vector<4x1xf32>
    %92 = vector.broadcast %91 : vector<4x1xf32> to vector<4x250xf32>
    %93 = arith.mulf %90, %92 : vector<4x250xf32>
    %c0_88 = arith.constant 0 : index
    %c0_89 = arith.constant 0 : index
    %94 = vector.load %arg8[%c0_88, %c0_89] : memref<4x1xf32, #tpu.memory_space<vmem>>, vector<4x1xf32>
    %95 = vector.broadcast %94 : vector<4x1xf32> to vector<4x250xf32>
    %96 = arith.addf %93, %95 : vector<4x250xf32>
    %cst_90 = arith.constant 0.000000e+00 : f32
    %97 = vector.broadcast %cst_90 : f32 to vector<4x250xf32>
    %98 = arith.maximumf %96, %97 : vector<4x250xf32>
    %99 = vector.extract_strided_slice %98 {offsets = [0, 0], sizes = [4, 68], strides = [1, 1]} : vector<4x250xf32> to vector<4x68xf32>
    %c0_91 = arith.constant 0 : index
    %c3_92 = arith.constant 3 : index
    %100 = vector.load %arg14[%c0_91, %c3_92] : memref<8x256xf32, #tpu.memory_space<vmem>>, vector<4x68xf32>
    tpu.vector_store %arg14[%c0_91, %c3_92], %99 {strides = array<i32>} : memref<8x256xf32, #tpu.memory_space<vmem>>, vector<4x68xf32>,
    %101 = vector.extract_strided_slice %98 {offsets = [0, 128], sizes = [4, 68], strides = [1, 1]} : vector<4x250xf32> to vector<4x68xf32>
    %c0_93 = arith.constant 0 : index
    %c131_94 = arith.constant 131 : index
    %102 = vector.load %arg14[%c0_93, %c131_94] : memref<8x256xf32, #tpu.memory_space<vmem>>, vector<4x68xf32>
    tpu.vector_store %arg14[%c0_93, %c131_94], %101 {strides = array<i32>} : memref<8x256xf32, #tpu.memory_space<vmem>>, vector<4x68xf32>,
    %c0_95 = arith.constant 0 : index
    %c0_96 = arith.constant 0 : index
    %103 = vector.load %arg14[%c0_95, %c0_96] : memref<8x256xf32, #tpu.memory_space<vmem>>, vector<8x256xf32>
    %104 = vector.extract_strided_slice %103 {offsets = [0, 0], sizes = [8, 250], strides = [1, 1]} : vector<8x256xf32> to vector<8x250xf32>
    %105 = vector.extract_strided_slice %103 {offsets = [0, 1], sizes = [8, 250], strides = [1, 1]} : vector<8x256xf32> to vector<8x250xf32>
    %106 = vector.extract_strided_slice %103 {offsets = [0, 2], sizes = [8, 250], strides = [1, 1]} : vector<8x256xf32> to vector<8x250xf32>
    %107 = vector.extract_strided_slice %103 {offsets = [0, 3], sizes = [8, 250], strides = [1, 1]} : vector<8x256xf32> to vector<8x250xf32>
    %108 = vector.extract_strided_slice %103 {offsets = [0, 4], sizes = [8, 250], strides = [1, 1]} : vector<8x256xf32> to vector<8x250xf32>
    %109 = vector.extract_strided_slice %103 {offsets = [0, 5], sizes = [8, 250], strides = [1, 1]} : vector<8x256xf32> to vector<8x250xf32>
    %110 = vector.extract_strided_slice %103 {offsets = [0, 6], sizes = [8, 250], strides = [1, 1]} : vector<8x256xf32> to vector<8x250xf32>
    %111 = tpu.concatenate %104, %105, %106, %107, %108, %109, %110 in 0 : vector<8x250xf32>, vector<8x250xf32>, vector<8x250xf32>, vector<8x250xf32>, vector<8x250xf32>, vector<8x250xf32>, vector<8x250xf32> -> vector<56x250xf32>
    %c0_97 = arith.constant 0 : index
    %c0_98 = arith.constant 0 : index
    %112 = vector.load %arg9[%c0_97, %c0_98] : memref<4x56xf32, #tpu.memory_space<vmem>>, vector<4x56xf32>
    %cst_99 = arith.constant dense<0.000000e+00> : vector<4x250xf32>
    %113 = tpu.matmul %112, %111, %cst_99 {dimension_numbers = #tpu.dot_dimension_numbers<[1], [0], [0], [1], [0, 0, 1, 1], [], []>} : vector<4x56xf32>, vector<56x250xf32>, vector<4x250xf32> -> vector<4x250xf32>
    %c0_100 = arith.constant 0 : index
    %c0_101 = arith.constant 0 : index
    %114 = vector.load %arg10[%c0_100, %c0_101] : memref<4x1xf32, #tpu.memory_space<vmem>>, vector<4x1xf32>
    %115 = vector.broadcast %114 : vector<4x1xf32> to vector<4x250xf32>
    %116 = arith.mulf %113, %115 : vector<4x250xf32>
    %c0_102 = arith.constant 0 : index
    %c0_103 = arith.constant 0 : index
    %117 = vector.load %arg11[%c0_102, %c0_103] : memref<4x1xf32, #tpu.memory_space<vmem>>, vector<4x1xf32>
    %118 = vector.broadcast %117 : vector<4x1xf32> to vector<4x250xf32>
    %119 = arith.addf %116, %118 : vector<4x250xf32>
    %cst_104 = arith.constant 0.000000e+00 : f32
    %120 = vector.broadcast %cst_104 : f32 to vector<4x250xf32>
    %121 = arith.maximumf %119, %120 : vector<4x250xf32>
    %122 = vector.extract_strided_slice %121 {offsets = [0, 0], sizes = [4, 68], strides = [1, 1]} : vector<4x250xf32> to vector<4x68xf32>
    %c0_105 = arith.constant 0 : index
    %c0_106 = arith.constant 0 : index
    %c0_107 = arith.constant 0 : index
    %123 = vector.load %arg12[%c0_105, %c0_106, %c0_107] : memref<1x4x136xf32, #tpu.memory_space<vmem>>, vector<1x4x68xf32>
    %124 = vector.shape_cast %123 : vector<1x4x68xf32> to vector<4x68xf32>
    %125 = vector.shape_cast %122 : vector<4x68xf32> to vector<1x4x68xf32>
    tpu.vector_store %arg12[%c0_105, %c0_106, %c0_107], %125 {strides = array<i32>} : memref<1x4x136xf32, #tpu.memory_space<vmem>>, vector<1x4x68xf32>,
    %126 = vector.extract_strided_slice %121 {offsets = [0, 128], sizes = [4, 68], strides = [1, 1]} : vector<4x250xf32> to vector<4x68xf32>
    %c0_108 = arith.constant 0 : index
    %c0_109 = arith.constant 0 : index
    %c68 = arith.constant 68 : index
    %127 = vector.load %arg12[%c0_108, %c0_109, %c68] : memref<1x4x136xf32, #tpu.memory_space<vmem>>, vector<1x4x68xf32>
    %128 = vector.shape_cast %127 : vector<1x4x68xf32> to vector<4x68xf32>
    %129 = vector.shape_cast %126 : vector<4x68xf32> to vector<1x4x68xf32>
    tpu.vector_store %arg12[%c0_108, %c0_109, %c68], %129 {strides = array<i32>} : memref<1x4x136xf32, #tpu.memory_space<vmem>>, vector<1x4x68xf32>,
    return
  }
  func.func @transform_0(%arg0: i32) -> (i32, i32, i32) {
    %c0_i32 = arith.constant 0 : i32
    %c0_i32_0 = arith.constant 0 : i32
    %c0_i32_1 = arith.constant 0 : i32
    return %arg0, %c0_i32, %c0_i32_0 : i32, i32, i32
  }
  func.func @transform_1(%arg0: i32) -> (i32, i32, i32) {
    %c0_i32 = arith.constant 0 : i32
    %c0_i32_0 = arith.constant 0 : i32
    %c0_i32_1 = arith.constant 0 : i32
    return %arg0, %c0_i32, %c0_i32_0 : i32, i32, i32
  }
  func.func @transform_2(%arg0: i32) -> (i32, i32, i32) {
    %c0_i32 = arith.constant 0 : i32
    %c0_i32_0 = arith.constant 0 : i32
    %c0_i32_1 = arith.constant 0 : i32
    %c0_i32_2 = arith.constant 0 : i32
    return %c0_i32, %c0_i32_0, %c0_i32_1 : i32, i32, i32
  }
  func.func @transform_3(%arg0: i32) -> (i32, i32, i32) {
    %c0_i32 = arith.constant 0 : i32
    %c0_i32_0 = arith.constant 0 : i32
    %c0_i32_1 = arith.constant 0 : i32
    %c0_i32_2 = arith.constant 0 : i32
    return %c0_i32, %c0_i32_0, %c0_i32_1 : i32, i32, i32
  }
  func.func @transform_4(%arg0: i32) -> (i32, i32) {
    %c0_i32 = arith.constant 0 : i32
    %c0_i32_0 = arith.constant 0 : i32
    %c0_i32_1 = arith.constant 0 : i32
    return %c0_i32, %c0_i32_0 : i32, i32
  }
  func.func @transform_5(%arg0: i32) -> (i32, i32) {
    %c0_i32 = arith.constant 0 : i32
    %c0_i32_0 = arith.constant 0 : i32
    %c0_i32_1 = arith.constant 0 : i32
    return %c0_i32, %c0_i32_0 : i32, i32
  }
  func.func @transform_6(%arg0: i32) -> (i32, i32) {
    %c0_i32 = arith.constant 0 : i32
    %c0_i32_0 = arith.constant 0 : i32
    %c0_i32_1 = arith.constant 0 : i32
    return %c0_i32, %c0_i32_0 : i32, i32
  }
  func.func @transform_7(%arg0: i32) -> (i32, i32) {
    %c0_i32 = arith.constant 0 : i32
    %c0_i32_0 = arith.constant 0 : i32
    %c0_i32_1 = arith.constant 0 : i32
    return %c0_i32, %c0_i32_0 : i32, i32
  }
  func.func @transform_8(%arg0: i32) -> (i32, i32) {
    %c0_i32 = arith.constant 0 : i32
    %c0_i32_0 = arith.constant 0 : i32
    %c0_i32_1 = arith.constant 0 : i32
    return %c0_i32, %c0_i32_0 : i32, i32
  }
  func.func @transform_9(%arg0: i32) -> (i32, i32) {
    %c0_i32 = arith.constant 0 : i32
    %c0_i32_0 = arith.constant 0 : i32
    %c0_i32_1 = arith.constant 0 : i32
    return %c0_i32, %c0_i32_0 : i32, i32
  }
  func.func @transform_10(%arg0: i32) -> (i32, i32) {
    %c0_i32 = arith.constant 0 : i32
    %c0_i32_0 = arith.constant 0 : i32
    %c0_i32_1 = arith.constant 0 : i32
    return %c0_i32, %c0_i32_0 : i32, i32
  }
  func.func @transform_11(%arg0: i32) -> (i32, i32, i32) {
    %c0_i32 = arith.constant 0 : i32
    %c0_i32_0 = arith.constant 0 : i32
    %c0_i32_1 = arith.constant 0 : i32
    return %arg0, %c0_i32, %c0_i32_0 : i32, i32, i32
  }
}

</mosaic_0001>

<llo_original>
// kernel: tpu_custom_call.1
$region0: #{tpu_custom_call.1}
  #allocation0 [shape = 'u32[]', space=smem, size = 0x4, offset = 0x4, fixed_abs, tag = 'smem constant byte address 0x4 - core index']
  #allocation1 [shape = 'u32[144,128]{1,0:T(1,128)}', space=vmem, size = 0x12000, scoped, tag = 'internal scratch']
  #allocation2 [shape = 'f32[8,256]{1,0:T(8,128)}', space=vmem, size = 0x2000, scoped, tag = 'scratch operand']
  #allocation3 [shape = 'f32[8,256]{1,0:T(8,128)}', space=vmem, size = 0x2000, scoped, tag = 'scratch operand']
  %s0 = inlined_call_operand.hbm [shape: f32[2,4,32], index: 0, kind: input, shape index: {}]
  %s1 = inlined_call_operand.vmem [shape: f32[2,4,136], index: 1, kind: input, shape index: {}]
  %s2 = inlined_call_operand.vmem [shape: f32[4,4,4], index: 2, kind: input, shape index: {}]
  %s3 = inlined_call_operand.hbm [shape: f32[4,16,64], index: 3, kind: input, shape index: {}]
  %s4 = inlined_call_operand.vmem [shape: f32[4,1], index: 4, kind: input, shape index: {}]
  %s5 = inlined_call_operand.vmem [shape: f32[4,56], index: 5, kind: input, shape index: {}]
  %s6 = inlined_call_operand.vmem [shape: f32[4,1], index: 6, kind: input, shape index: {}]
  %s7 = inlined_call_operand.vmem [shape: f32[4,1], index: 7, kind: input, shape index: {}]
  %s8 = inlined_call_operand.vmem [shape: f32[4,56], index: 8, kind: input, shape index: {}]
  %s9 = inlined_call_operand.vmem [shape: f32[4,1], index: 9, kind: input, shape index: {}]
  %s10 = inlined_call_operand.vmem [shape: f32[4,1], index: 10, kind: input, shape index: {}]
  %s11 = inlined_call_operand.hbm [shape: f32[2,4,136], index: 11, kind: output, shape index: {}]
  %s12 = sld [smem:[#allocation0]]
  $region85: #{tpu_custom_call.1} parent=0
    _
  %s14 = ssub.s32 1, %s12
  %s15 = scalar_select 0, %s14, %s12
  $region1: #{tpu_custom_call.1} parent=0
    #allocation4 [shape = 'u8[4096]{0}', space=vmem, size = 0x1000, scoped, tag = 'input window, operand 0']
    #allocation5 [shape = 's32[2]{0}', space=sflag, size = 0x8, scoped, tag = 'scoped memory for tpu_custom_call.1']
    #allocation6 [shape = 's32[2]{0}', space=sflag, size = 0x8, scoped, tag = 'scoped memory for tpu_custom_call.1']
    #allocation7 [shape = 'u8[32768]{0}', space=vmem, size = 0x8000, scoped, tag = 'input window, operand 3, single buffered']
    #allocation8 [shape = 's32[1]{0}', space=sflag, size = 0x4, scoped, tag = 'scoped memory for tpu_custom_call.1']
    #allocation9 [shape = 'u8[8192]{0}', space=vmem, size = 0x2000, scoped, tag = 'output window, operand 0']
    %16 = vsyncpa [#allocation5], 0
    %s17 = scalar_lea.sflag [#allocation5], 1
    %18 = vsyncpa %s17, 0
    %19 = vsyncpa [#allocation8], 0
    %20 = vsyncpa [#allocation6], 0
    %s21 = scalar_lea.sflag [#allocation6], 1
    %22 = vsyncpa %s21, 0
    loop: start=0, step=1, limit=4
    $region2: #{tpu_custom_call.1} parent=1 // loop_pre_header
      _
    $region3: #{tpu_custom_call.1} parent=1 // loop_header
      %s24 = sphi 0, %s28
      %p25 = scmp.ge.s32.totalorder %s24, 4
      %s34 = sphi 0, %s36
      %s37 = sphi 0, %s34
      %s38 = sphi 0, %s37
      %s54 = sphi 0, %s38
      %s60 = sphi 0, %s62
      %s63 = sphi 0, %s60
      %s64 = sphi 0, %s63
      %s80 = sphi 0, %s64
      %s84 = sphi 0, %s84
      %s86 = sphi 0, %s84
      %s87 = sphi 0, %s86
      %s101 = sphi 0, %s87
      %s105 = sphi 0, %s105
      %s107 = sphi 0, %s105
      %s108 = sphi 0, %s107
      %s122 = sphi 0, %s108
      %s126 = sphi 0, %s126
      %s128 = sphi 0, %s126
      %s129 = sphi 0, %s128
      %s143 = sphi 0, %s129
      %s147 = sphi 0, %s147
      %s149 = sphi 0, %s147
      %s150 = sphi 0, %s149
      %s164 = sphi 0, %s150
      %s168 = sphi 0, %s168
      %s170 = sphi 0, %s168
      %s171 = sphi 0, %s170
      %s185 = sphi 0, %s171
      %s189 = sphi 0, %s189
      %s191 = sphi 0, %s189
      %s192 = sphi 0, %s191
      %s206 = sphi 0, %s192
      %s210 = sphi 0, %s210
      %s212 = sphi 0, %s210
      %s213 = sphi 0, %s212
      %s227 = sphi 0, %s213
      %s231 = sphi 0, %s231
      %s233 = sphi 0, %s231
      %s234 = sphi 0, %s233
      %s248 = sphi 0, %s234
      %s252 = sphi 0, %s252
      %s254 = sphi 0, %s252
      %s255 = sphi 0, %s254
      %s269 = sphi 0, %s255
      %s275 = sphi 0, %s277
      %s278 = sphi 0, %s275
      %s279 = sphi 0, %s278
      %s295 = sphi 0, %s279
    $region4: #{tpu_custom_call.1} parent=1 // loop_header_branch
      %27 = sbr.rel (%p25) target = $region8
    $region5: #{tpu_custom_call.1} parent=1 // loop_body
      %s29 = ssub.s32 %s24, 1
      %s30 = ssub.s32 %s24, 2
      %s31 = sadd.s32 %s24, 1
      %s32 = ssub.s32 %s24, %s31
      %p33 = scmp.eq.s32.totalorder %s32, 0
      %s35 = sadd.s32 %s34, 1
      %s36 = scalar_select %p33, %s34, %s35
      %p39 = pneg %p33
      %p40 = scmp.eq.s32.totalorder %s24, 1
      %p41 = por %p39, %p40
      %p42 = scmp.ne.s32.totalorder %s34, %s37
      %p43 = scmp.eq.s32.totalorder %s24, 0
      %p44 = por %p42, %p43
      %p45 = scmp.ne.s32.totalorder %s34, %s37
      %p46 = scmp.eq.s32.totalorder %s29, 1
      %p47 = por %p45, %p46
      %p48 = scmp.ne.s32.totalorder %s37, %s38
      %p49 = scmp.eq.s32.totalorder %s29, 0
      %p50 = por %p48, %p49
      %p51 = scmp.ne.s32.totalorder %s37, %s38
      %p52 = scmp.eq.s32.totalorder %s30, 1
      %p53 = por %p51, %p52
      %p55 = scmp.ne.s32.totalorder %s38, %s54
      %p56 = scmp.eq.s32.totalorder %s30, 0
      %p57 = por %p55, %p56
      %s58 = ssub.s32 %s24, %s31
      %p59 = scmp.eq.s32.totalorder %s58, 0
      %s61 = sadd.s32 %s60, 1
      %s62 = scalar_select %p59, %s60, %s61
      %p65 = pneg %p59
      %p66 = scmp.eq.s32.totalorder %s24, 1
      %p67 = por %p65, %p66
      %p68 = scmp.ne.s32.totalorder %s60, %s63
      %p69 = scmp.eq.s32.totalorder %s24, 0
      %p70 = por %p68, %p69
      %p71 = scmp.ne.s32.totalorder %s60, %s63
      %p72 = scmp.eq.s32.totalorder %s29, 1
      %p73 = por %p71, %p72
      %p74 = scmp.ne.s32.totalorder %s63, %s64
      %p75 = scmp.eq.s32.totalorder %s29, 0
      %p76 = por %p74, %p75
      %p77 = scmp.ne.s32.totalorder %s63, %s64
      %p78 = scmp.eq.s32.totalorder %s30, 1
      %p79 = por %p77, %p78
      %p81 = scmp.ne.s32.totalorder %s64, %s80
      %p82 = scmp.eq.s32.totalorder %s30, 0
      %p83 = por %p81, %p82
      %s85 = sadd.s32 %s84, 1
      %p88 = scmp.eq.s32.totalorder %s24, 1
      %p89 = scmp.ne.s32.totalorder %s84, %s86
      %p90 = scmp.eq.s32.totalorder %s24, 0
      %p91 = por %p89, %p90
      %p92 = scmp.ne.s32.totalorder %s84, %s86
      %p93 = scmp.eq.s32.totalorder %s29, 1
      %p94 = por %p92, %p93
      %p95 = scmp.ne.s32.totalorder %s86, %s87
      %p96 = scmp.eq.s32.totalorder %s29, 0
      %p97 = por %p95, %p96
      %p98 = scmp.ne.s32.totalorder %s86, %s87
      %p99 = scmp.eq.s32.totalorder %s30, 1
      %p100 = por %p98, %p99
      %p102 = scmp.ne.s32.totalorder %s87, %s101
      %p103 = scmp.eq.s32.totalorder %s30, 0
      %p104 = por %p102, %p103
      %s106 = sadd.s32 %s105, 1
      %p109 = scmp.eq.s32.totalorder %s24, 1
      %p110 = scmp.ne.s32.totalorder %s105, %s107
      %p111 = scmp.eq.s32.totalorder %s24, 0
      %p112 = por %p110, %p111
      %p113 = scmp.ne.s32.totalorder %s105, %s107
      %p114 = scmp.eq.s32.totalorder %s29, 1
      %p115 = por %p113, %p114
      %p116 = scmp.ne.s32.totalorder %s107, %s108
      %p117 = scmp.eq.s32.totalorder %s29, 0
      %p118 = por %p116, %p117
      %p119 = scmp.ne.s32.totalorder %s107, %s108
      %p120 = scmp.eq.s32.totalorder %s30, 1
      %p121 = por %p119, %p120
      %p123 = scmp.ne.s32.totalorder %s108, %s122
      %p124 = scmp.eq.s32.totalorder %s30, 0
      %p125 = por %p123, %p124
      %s127 = sadd.s32 %s126, 1
      %p130 = scmp.eq.s32.totalorder %s24, 1
      %p131 = scmp.ne.s32.totalorder %s126, %s128
      %p132 = scmp.eq.s32.totalorder %s24, 0
      %p133 = por %p131, %p132
      %p134 = scmp.ne.s32.totalorder %s126, %s128
      %p135 = scmp.eq.s32.totalorder %s29, 1
      %p136 = por %p134, %p135
      %p137 = scmp.ne.s32.totalorder %s128, %s129
      %p138 = scmp.eq.s32.totalorder %s29, 0
      %p139 = por %p137, %p138
      %p140 = scmp.ne.s32.totalorder %s128, %s129
      %p141 = scmp.eq.s32.totalorder %s30, 1
      %p142 = por %p140, %p141
      %p144 = scmp.ne.s32.totalorder %s129, %s143
      %p145 = scmp.eq.s32.totalorder %s30, 0
      %p146 = por %p144, %p145
      %s148 = sadd.s32 %s147, 1
      %p151 = scmp.eq.s32.totalorder %s24, 1
      %p152 = scmp.ne.s32.totalorder %s147, %s149
      %p153 = scmp.eq.s32.totalorder %s24, 0
      %p154 = por %p152, %p153
      %p155 = scmp.ne.s32.totalorder %s147, %s149
      %p156 = scmp.eq.s32.totalorder %s29, 1
      %p157 = por %p155, %p156
      %p158 = scmp.ne.s32.totalorder %s149, %s150
      %p159 = scmp.eq.s32.totalorder %s29, 0
      %p160 = por %p158, %p159
      %p161 = scmp.ne.s32.totalorder %s149, %s150
      %p162 = scmp.eq.s32.totalorder %s30, 1
      %p163 = por %p161, %p162
      %p165 = scmp.ne.s32.totalorder %s150, %s164
      %p166 = scmp.eq.s32.totalorder %s30, 0
      %p167 = por %p165, %p166
      %s169 = sadd.s32 %s168, 1
      %p172 = scmp.eq.s32.totalorder %s24, 1
      %p173 = scmp.ne.s32.totalorder %s168, %s170
      %p174 = scmp.eq.s32.totalorder %s24, 0
      %p175 = por %p173, %p174
      %p176 = scmp.ne.s32.totalorder %s168, %s170
      %p177 = scmp.eq.s32.totalorder %s29, 1
      %p178 = por %p176, %p177
      %p179 = scmp.ne.s32.totalorder %s170, %s171
      %p180 = scmp.eq.s32.totalorder %s29, 0
      %p181 = por %p179, %p180
      %p182 = scmp.ne.s32.totalorder %s170, %s171
      %p183 = scmp.eq.s32.totalorder %s30, 1
      %p184 = por %p182, %p183
      %p186 = scmp.ne.s32.totalorder %s171, %s185
      %p187 = scmp.eq.s32.totalorder %s30, 0
      %p188 = por %p186, %p187
      %s190 = sadd.s32 %s189, 1
      %p193 = scmp.eq.s32.totalorder %s24, 1
      %p194 = scmp.ne.s32.totalorder %s189, %s191
      %p195 = scmp.eq.s32.totalorder %s24, 0
      %p196 = por %p194, %p195
      %p197 = scmp.ne.s32.totalorder %s189, %s191
      %p198 = scmp.eq.s32.totalorder %s29, 1
      %p199 = por %p197, %p198
      %p200 = scmp.ne.s32.totalorder %s191, %s192
      %p201 = scmp.eq.s32.totalorder %s29, 0
      %p202 = por %p200, %p201
      %p203 = scmp.ne.s32.totalorder %s191, %s192
      %p204 = scmp.eq.s32.totalorder %s30, 1
      %p205 = por %p203, %p204
      %p207 = scmp.ne.s32.totalorder %s192, %s206
      %p208 = scmp.eq.s32.totalorder %s30, 0
      %p209 = por %p207, %p208
      %s211 = sadd.s32 %s210, 1
      %p214 = scmp.eq.s32.totalorder %s24, 1
      %p215 = scmp.ne.s32.totalorder %s210, %s212
      %p216 = scmp.eq.s32.totalorder %s24, 0
      %p217 = por %p215, %p216
      %p218 = scmp.ne.s32.totalorder %s210, %s212
      %p219 = scmp.eq.s32.totalorder %s29, 1
      %p220 = por %p218, %p219
      %p221 = scmp.ne.s32.totalorder %s212, %s213
      %p222 = scmp.eq.s32.totalorder %s29, 0
      %p223 = por %p221, %p222
      %p224 = scmp.ne.s32.totalorder %s212, %s213
      %p225 = scmp.eq.s32.totalorder %s30, 1
      %p226 = por %p224, %p225
      %p228 = scmp.ne.s32.totalorder %s213, %s227
      %p229 = scmp.eq.s32.totalorder %s30, 0
      %p230 = por %p228, %p229
      %s232 = sadd.s32 %s231, 1
      %p235 = scmp.eq.s32.totalorder %s24, 1
      %p236 = scmp.ne.s32.totalorder %s231, %s233
      %p237 = scmp.eq.s32.totalorder %s24, 0
      %p238 = por %p236, %p237
      %p239 = scmp.ne.s32.totalorder %s231, %s233
      %p240 = scmp.eq.s32.totalorder %s29, 1
      %p241 = por %p239, %p240
      %p242 = scmp.ne.s32.totalorder %s233, %s234
      %p243 = scmp.eq.s32.totalorder %s29, 0
      %p244 = por %p242, %p243
      %p245 = scmp.ne.s32.totalorder %s233, %s234
      %p246 = scmp.eq.s32.totalorder %s30, 1
      %p247 = por %p245, %p246
      %p249 = scmp.ne.s32.totalorder %s234, %s248
      %p250 = scmp.eq.s32.totalorder %s30, 0
      %p251 = por %p249, %p250
      %s253 = sadd.s32 %s252, 1
      %p256 = scmp.eq.s32.totalorder %s24, 1
      %p257 = scmp.ne.s32.totalorder %s252, %s254
      %p258 = scmp.eq.s32.totalorder %s24, 0
      %p259 = por %p257, %p258
      %p260 = scmp.ne.s32.totalorder %s252, %s254
      %p261 = scmp.eq.s32.totalorder %s29, 1
      %p262 = por %p260, %p261
      %p263 = scmp.ne.s32.totalorder %s254, %s255
      %p264 = scmp.eq.s32.totalorder %s29, 0
      %p265 = por %p263, %p264
      %p266 = scmp.ne.s32.totalorder %s254, %s255
      %p267 = scmp.eq.s32.totalorder %s30, 1
      %p268 = por %p266, %p267
      %p270 = scmp.ne.s32.totalorder %s255, %s269
      %p271 = scmp.eq.s32.totalorder %s30, 0
      %p272 = por %p270, %p271
      %s273 = ssub.s32 %s24, %s31
      %p274 = scmp.eq.s32.totalorder %s273, 0
      %s276 = sadd.s32 %s275, 1
      %s277 = scalar_select %p274, %s275, %s276
      %p280 = pneg %p274
      %p281 = scmp.eq.s32.totalorder %s24, 1
      %p282 = por %p280, %p281
      %p283 = scmp.ne.s32.totalorder %s275, %s278
      %p284 = scmp.eq.s32.totalorder %s24, 0
      %p285 = por %p283, %p284
      %p286 = scmp.ne.s32.totalorder %s275, %s278
      %p287 = scmp.eq.s32.totalorder %s29, 1
      %p288 = por %p286, %p287
      %p289 = scmp.ne.s32.totalorder %s278, %s279
      %p290 = scmp.eq.s32.totalorder %s29, 0
      %p291 = por %p289, %p290
      %p292 = scmp.ne.s32.totalorder %s278, %s279
      %p293 = scmp.eq.s32.totalorder %s30, 1
      %p294 = por %p292, %p293
      %p296 = scmp.ne.s32.totalorder %s279, %s295
      %p297 = scmp.eq.s32.totalorder %s30, 0
      %p298 = por %p296, %p297
      %p299 = scmp.le.s32.totalorder 1, %s24
      %p300 = scmp.lt.s32.totalorder %s24, 3
      %p301 = pnand %p299, %p300
      %p302 = pneg %p301
      // Predicated region
      $region9: #{tpu_custom_call.1} parent=5 // pred_check
        _
      $region10: #{tpu_custom_call.1} parent=5 // pred_check_branch
        %304 = sbr.rel (%p301) target = $region12
      $region11: #{tpu_custom_call.1} parent=5 // pred_region
        %s305 = ssub.s32 %s24, 1
        // Predicated region
        $region13: #{tpu_custom_call.1} parent=11 // pred_check
          %p306 = pneg %p97
        $region14: #{tpu_custom_call.1} parent=11 // pred_check_branch
          %308 = sbr.rel (%p306) target = $region16
        $region15: #{tpu_custom_call.1} parent=11 // pred_region
          _
        $region16: #{tpu_custom_call.1} parent=11 // pred_fallthru
          _
        // Predicated region
        $region17: #{tpu_custom_call.1} parent=11 // pred_check
          %p309 = pneg %p118
        $region18: #{tpu_custom_call.1} parent=11 // pred_check_branch
          %311 = sbr.rel (%p309) target = $region20
        $region19: #{tpu_custom_call.1} parent=11 // pred_region
          %s313 = ssub.s32 1024, 1024
          %314 = vsyncadd [#allocation8], %s313
          %s315 = sshll.u32 [#allocation7], 4
          %s316 = int_to_ptr.vmem [resolvable:$true] %s315
          %321 = dma.hbm_to_vmem [thread:$0]  %s3, 1024, %s316, [#allocation8], 128, 128, 8
        $region20: #{tpu_custom_call.1} parent=11 // pred_fallthru
          _
        // Predicated region
        $region21: #{tpu_custom_call.1} parent=11 // pred_check
          %p322 = pneg %p139
        $region22: #{tpu_custom_call.1} parent=11 // pred_check_branch
          %324 = sbr.rel (%p322) target = $region24
        $region23: #{tpu_custom_call.1} parent=11 // pred_region
          _
        $region24: #{tpu_custom_call.1} parent=11 // pred_fallthru
          _
        // Predicated region
        $region25: #{tpu_custom_call.1} parent=11 // pred_check
          %p325 = pneg %p160
        $region26: #{tpu_custom_call.1} parent=11 // pred_check_branch
          %327 = sbr.rel (%p325) target = $region28
        $region27: #{tpu_custom_call.1} parent=11 // pred_region
          _
        $region28: #{tpu_custom_call.1} parent=11 // pred_fallthru
          _
        // Predicated region
        $region29: #{tpu_custom_call.1} parent=11 // pred_check
          %p328 = pneg %p181
        $region30: #{tpu_custom_call.1} parent=11 // pred_check_branch
          %330 = sbr.rel (%p328) target = $region32
        $region31: #{tpu_custom_call.1} parent=11 // pred_region
          _
        $region32: #{tpu_custom_call.1} parent=11 // pred_fallthru
          _
        // Predicated region
        $region33: #{tpu_custom_call.1} parent=11 // pred_check
          %p331 = pneg %p202
        $region34: #{tpu_custom_call.1} parent=11 // pred_check_branch
          %333 = sbr.rel (%p331) target = $region36
        $region35: #{tpu_custom_call.1} parent=11 // pred_region
          _
        $region36: #{tpu_custom_call.1} parent=11 // pred_fallthru
          _
        // Predicated region
        $region37: #{tpu_custom_call.1} parent=11 // pred_check
          %p334 = pneg %p223
        $region38: #{tpu_custom_call.1} parent=11 // pred_check_branch
          %336 = sbr.rel (%p334) target = $region40
        $region39: #{tpu_custom_call.1} parent=11 // pred_region
          _
        $region40: #{tpu_custom_call.1} parent=11 // pred_fallthru
          _
        // Predicated region
        $region41: #{tpu_custom_call.1} parent=11 // pred_check
          %p337 = pneg %p244
        $region42: #{tpu_custom_call.1} parent=11 // pred_check_branch
          %339 = sbr.rel (%p337) target = $region44
        $region43: #{tpu_custom_call.1} parent=11 // pred_region
          _
        $region44: #{tpu_custom_call.1} parent=11 // pred_fallthru
          _
        // Predicated region
        $region45: #{tpu_custom_call.1} parent=11 // pred_check
          %p340 = pneg %p265
        $region46: #{tpu_custom_call.1} parent=11 // pred_check_branch
          %342 = sbr.rel (%p340) target = $region48
        $region47: #{tpu_custom_call.1} parent=11 // pred_region
          _
        $region48: #{tpu_custom_call.1} parent=11 // pred_fallthru
          _
      $region12: #{tpu_custom_call.1} parent=5 // pred_fallthru
        _
      %p343 = scmp.lt.s32.totalorder %s24, 2
      // Predicated region
      $region49: #{tpu_custom_call.1} parent=5 // pred_check
        %p344 = pneg %p343
      $region50: #{tpu_custom_call.1} parent=5 // pred_check_branch
        %346 = sbr.rel (%p344) target = $region52
      $region51: #{tpu_custom_call.1} parent=5 // pred_region
        // Predicated region
        $region53: #{tpu_custom_call.1} parent=51 // pred_check
          %p347 = pneg %p44
        $region54: #{tpu_custom_call.1} parent=51 // pred_check_branch
          %349 = sbr.rel (%p347) target = $region56
        $region55: #{tpu_custom_call.1} parent=51 // pred_region
          %s350 = sand.u32 %s34, 1
          %s351 = scalar_lea.sflag [#allocation5], %s350
          %s352 = sand.u32 %s34, 1
          %s353 = smul.addr %s352, 4
          %s354 = scalar_lea.vmem [#allocation4], %s353
          %s356 = ssub.s32 64, 64
          %357 = vsyncadd %s351, %s356
          %s358 = smul.addr %s24, 64
          %s359 = scalar_lea.hbm %s0, %s358
          %s361 = sshll.u32 %s354, 4
          %s362 = int_to_ptr.vmem [resolvable:$true] %s361
          %364 = dma.hbm_to_vmem [thread:$0]  %s359, 64, %s362, %s351
        $region56: #{tpu_custom_call.1} parent=51 // pred_fallthru
          _
        // Predicated region
        $region57: #{tpu_custom_call.1} parent=51 // pred_check
          %p365 = pneg %p70
        $region58: #{tpu_custom_call.1} parent=51 // pred_check_branch
          %367 = sbr.rel (%p365) target = $region60
        $region59: #{tpu_custom_call.1} parent=51 // pred_region
          %p368 = scmp.lt.s32.totalorder %s24, 1
          %s369 = scalar_select %p368, %s24, 1
          %s370 = smul.addr %s369, 2
          %s371 = smul.addr %s370, 4
          %s372 = scalar_lea.vmem %s1, %s371
        $region60: #{tpu_custom_call.1} parent=51 // pred_fallthru
          _
      $region52: #{tpu_custom_call.1} parent=5 // pred_fallthru
        _
      %p373 = scmp.le.s32.totalorder 1, %s24
      %p374 = scmp.lt.s32.totalorder %s24, 3
      %p375 = pnand %p373, %p374
      %p376 = pneg %p375
      // Predicated region
      $region61: #{tpu_custom_call.1} parent=5 // pred_check
        _
      $region62: #{tpu_custom_call.1} parent=5 // pred_check_branch
        %378 = sbr.rel (%p375) target = $region64
      $region63: #{tpu_custom_call.1} parent=5 // pred_region
        %s379 = ssub.s32 %s24, 1
        %s380 = sand.u32 %s37, 1
        %s381 = scalar_lea.sflag [#allocation5], %s380
        %s382 = sand.u32 %s37, 1
        %s383 = smul.addr %s382, 4
        %s384 = scalar_lea.vmem [#allocation4], %s383
        // Predicated region
        $region65: #{tpu_custom_call.1} parent=63 // pred_check
          %p385 = pneg %p50
        $region66: #{tpu_custom_call.1} parent=63 // pred_check_branch
          %387 = sbr.rel (%p385) target = $region68
        $region67: #{tpu_custom_call.1} parent=63 // pred_region
          %388 = dma.done %s381, 64
        $region68: #{tpu_custom_call.1} parent=63 // pred_fallthru
          _
        // Predicated region
        $region69: #{tpu_custom_call.1} parent=63 // pred_check
          %p389 = pneg %p118
        $region70: #{tpu_custom_call.1} parent=63 // pred_check_branch
          %391 = sbr.rel (%p389) target = $region72
        $region71: #{tpu_custom_call.1} parent=63 // pred_region
          %392 = dma.done [#allocation8], 1024
        $region72: #{tpu_custom_call.1} parent=63 // pred_fallthru
          _
        %s393 = sand.u32 %s37, 1
        %s394 = scalar_lea.sflag [#allocation5], %s393
        %s395 = sand.u32 %s37, 1
        %s396 = smul.addr %s395, 4
        %s397 = scalar_lea.vmem [#allocation4], %s396
        %p398 = pneg %p50
        %p399 = pneg %p47
        %p400 = scmp.lt.s32.totalorder %s29, 1
        %s401 = scalar_select %p400, %s29, 1
        %s402 = smul.addr %s401, 2
        %s403 = smul.addr %s402, 4
        %s404 = scalar_lea.vmem %s1, %s403
        %p405 = pneg %p76
        %p406 = pneg %p73
        %p407 = pneg %p97
        %p408 = pneg %p94
        %p409 = pneg %p118
        %p410 = pneg %p115
        %p411 = pneg %p139
        %p412 = pneg %p136
        %p413 = pneg %p160
        %p414 = pneg %p157
        %p415 = pneg %p181
        %p416 = pneg %p178
        %p417 = pneg %p202
        %p418 = pneg %p199
        %p419 = pneg %p223
        %p420 = pneg %p220
        %p421 = pneg %p244
        %p422 = pneg %p241
        %p423 = pneg %p265
        %p424 = pneg %p262
        %p425 = pneg %p291
        %p426 = pneg %p288
        %s427 = sand.u32 %s278, 1
        %s428 = scalar_lea.sflag [#allocation6], %s427
        %s429 = sand.u32 %s278, 1
        %s430 = smul.addr %s429, 8
        %s431 = scalar_lea.vmem [#allocation9], %s430
        %p432 = scmp.lt.s32.totalorder %s29, 1
        %s433 = scalar_select %p432, %s29, 1
        %s434 = smul.addr %s433, 2
        %s435 = smul.addr %s434, 4
        %s436 = scalar_lea.vmem %s1, %s435
        %437 = vst [vmem:[#allocation2] sm:$0xff] 0.0
        %438 = vst [vmem:[#allocation2 + $0x8] sm:$0xff] 0.0
        %439 = vst [vmem:[#allocation3] sm:$0xff] 0.0
        %440 = vst [vmem:[#allocation3 + $0x8] sm:$0xff] 0.0
        %v441 = vld [vmem:[%s384] sm:$0xf]
        %v442 = vld [vmem:[%s436] sm:$0xff]
        %v443 = vld [vmem:[%s2] sm:$0xf]
        %vm444 = vcmask 31744
        %v446 = vsel %vm444, %v443, 0
        %vm448 = vcmask 1043456
        %v450 = vsel %vm448, %v441, 0
        %452 = vmatprep.subr.mxu0 0.0
        %453 = vmatpush1.msra.mxu0 %v450
        %454 = vmatprep.subr.mxu0 0.0
        %455 = vmatpush1.msra.mxu0 0.0
        %456 = vmatprep.subr.mxu0 0.0
        %457 = vmatpush1.msra.mxu0 0.0
        %458 = vmatprep.subr.mxu0 0.0
        %459 = vmatpush1.msra.mxu0 0.0
        %460 = vmatprep.subr.mxu0 0.0
        %461 = vmatpush1.msra.mxu0 0.0
        %462 = vmatprep.subr.mxu0 0.0
        %463 = vmatpush1.msra.mxu0 0.0
        %464 = vmatprep.subr.mxu0 0.0
        %465 = vmatpush1.msra.mxu0 0.0
        %466 = vmatprep.subr.mxu0 0.0
        %467 = vmatpush1.msra.mxu0 0.0
        %468 = vmatprep.subr.mxu0 0.0
        %469 = vmatpush1.msra.mxu0 0.0
        %470 = vmatprep.subr.mxu0 0.0
        %471 = vmatpush1.msra.mxu0 0.0
        %472 = vmatprep.subr.mxu0 0.0
        %473 = vmatpush1.msra.mxu0 0.0
        %474 = vmatprep.subr.mxu0 0.0
        %475 = vmatpush1.msra.mxu0 0.0
        %476 = vmatprep.subr.mxu0 0.0
        %477 = vmatpush1.msra.mxu0 0.0
        %478 = vmatprep.subr.mxu0 0.0
        %479 = vmatpush1.msra.mxu0 0.0
        %480 = vmatprep.subr.mxu0 0.0
        %481 = vmatpush1.msra.mxu0 0.0
        %482 = vmatprep.subr.mxu0 0.0
        %483 = vmatpush1.msra.mxu0 0.0
        %484 = vmatprep.subr.mxu0 0.0
        %485 = vmatpush1.msra.mxu0 0.0
        %486 = vmatprep.subr.mxu0 0.0
        %487 = vmatpush1.msra.mxu0 0.0
        %488 = vmatprep.subr.mxu0 0.0
        %489 = vmatpush1.msra.mxu0 0.0
        %490 = vmatprep.subr.mxu0 0.0
        %491 = vmatpush1.msra.mxu0 0.0
        %492 = vmatprep.subr.mxu0 0.0
        %493 = vmatpush1.msra.mxu0 0.0
        %494 = vmatprep.subr.mxu0 0.0
        %495 = vmatpush1.msra.mxu0 0.0
        %496 = vmatprep.subr.mxu0 0.0
        %497 = vmatpush1.msra.mxu0 0.0
        %498 = vmatprep.subr.mxu0 0.0
        %499 = vmatpush1.msra.mxu0 0.0
        %500 = vmatprep.subr.mxu0 0.0
        %501 = vmatpush1.msra.mxu0 0.0
        %502 = vmatprep.subr.mxu0 0.0
        %503 = vmatpush1.msra.mxu0 0.0
        %504 = vmatprep.subr.mxu0 0.0
        %505 = vmatpush1.msra.mxu0 0.0
        %506 = vmatprep.subr.mxu0 0.0
        %507 = vmatpush1.msra.mxu0 0.0
        %508 = vmatprep.subr.mxu0 0.0
        %509 = vmatpush1.msra.mxu0 0.0
        %510 = vmatprep.subr.mxu0 0.0
        %511 = vmatpush1.msra.mxu0 0.0
        %512 = vmatprep.subr.mxu0 0.0
        %513 = vmatpush1.msra.mxu0 0.0
        %514 = vmatprep.subr.mxu0 0.0
        %515 = vmatpush1.msra.mxu0 0.0
        %516 = vmatprep.mubr.f32.mxu0 0.0
        %517 = vmatmul.mubr.f32.gmra.mrb[0].mxu0 %v446
        %v518 = vpop.f32.mrb[0].mxu0
        %v519 = vadd.f32 0.0, %v518
        %v520 = vpop.f32.mrb[0].mxu0
        %521 = vdwg.mxu0
        %v522 = vld [vmem:[#allocation7] sm:$0xff]
        %v523 = vld [vmem:[#allocation7 + $0x8] sm:$0xff]
        %s524 = scalar_lea.vmem %s2, 4
        %v525 = vld [vmem:[%s524] sm:$0xf]
        %v527 = vsel %vm444, %v525, 0
        %529 = vmatprep.subr.mxu0 0.0
        %530 = vmatpush1.msra.mxu0 %v450
        %531 = vmatprep.subr.mxu0 0.0
        %532 = vmatpush1.msra.mxu0 0.0
        %533 = vmatprep.subr.mxu0 0.0
        %534 = vmatpush1.msra.mxu0 0.0
        %535 = vmatprep.subr.mxu0 0.0
        %536 = vmatpush1.msra.mxu0 0.0
        %537 = vmatprep.subr.mxu0 0.0
        %538 = vmatpush1.msra.mxu0 0.0
        %539 = vmatprep.subr.mxu0 0.0
        %540 = vmatpush1.msra.mxu0 0.0
        %541 = vmatprep.subr.mxu0 0.0
        %542 = vmatpush1.msra.mxu0 0.0
        %543 = vmatprep.subr.mxu0 0.0
        %544 = vmatpush1.msra.mxu0 0.0
        %545 = vmatprep.subr.mxu0 0.0
        %546 = vmatpush1.msra.mxu0 0.0
        %547 = vmatprep.subr.mxu0 0.0
        %548 = vmatpush1.msra.mxu0 0.0
        %549 = vmatprep.subr.mxu0 0.0
        %550 = vmatpush1.msra.mxu0 0.0
        %551 = vmatprep.subr.mxu0 0.0
        %552 = vmatpush1.msra.mxu0 0.0
        %553 = vmatprep.subr.mxu0 0.0
        %554 = vmatpush1.msra.mxu0 0.0
        %555 = vmatprep.subr.mxu0 0.0
        %556 = vmatpush1.msra.mxu0 0.0
        %557 = vmatprep.subr.mxu0 0.0
        %558 = vmatpush1.msra.mxu0 0.0
        %559 = vmatprep.subr.mxu0 0.0
        %560 = vmatpush1.msra.mxu0 0.0
        %561 = vmatprep.subr.mxu0 0.0
        %562 = vmatpush1.msra.mxu0 0.0
        %563 = vmatprep.subr.mxu0 0.0
        %564 = vmatpush1.msra.mxu0 0.0
        %565 = vmatprep.subr.mxu0 0.0
        %566 = vmatpush1.msra.mxu0 0.0
        %567 = vmatprep.subr.mxu0 0.0
        %568 = vmatpush1.msra.mxu0 0.0
        %569 = vmatprep.subr.mxu0 0.0
        %570 = vmatpush1.msra.mxu0 0.0
        %571 = vmatprep.subr.mxu0 0.0
        %572 = vmatpush1.msra.mxu0 0.0
        %573 = vmatprep.subr.mxu0 0.0
        %574 = vmatpush1.msra.mxu0 0.0
        %575 = vmatprep.subr.mxu0 0.0
        %576 = vmatpush1.msra.mxu0 0.0
        %577 = vmatprep.subr.mxu0 0.0
        %578 = vmatpush1.msra.mxu0 0.0
        %579 = vmatprep.subr.mxu0 0.0
        %580 = vmatpush1.msra.mxu0 0.0
        %581 = vmatprep.subr.mxu0 0.0
        %582 = vmatpush1.msra.mxu0 0.0
        %583 = vmatprep.subr.mxu0 0.0
        %584 = vmatpush1.msra.mxu0 0.0
        %585 = vmatprep.subr.mxu0 0.0
        %586 = vmatpush1.msra.mxu0 0.0
        %587 = vmatprep.subr.mxu0 0.0
        %588 = vmatpush1.msra.mxu0 0.0
        %589 = vmatprep.subr.mxu0 0.0
        %590 = vmatpush1.msra.mxu0 0.0
        %591 = vmatprep.subr.mxu0 0.0
        %592 = vmatpush1.msra.mxu0 0.0
        %593 = vmatprep.mubr.f32.mxu0 0.0
        %594 = vmatmul.mubr.f32.gmra.mrb[0].mxu0 %v527
        %v595 = vpop.f32.mrb[0].mxu0
        %v596 = vadd.f32 0.0, %v595
        %v597 = vpop.f32.mrb[0].mxu0
        %598 = vdwg.mxu0
        %s599 = scalar_lea.vmem [#allocation7], 16
        %v600 = vld [vmem:[%s599] sm:$0xff]
        %v601 = vld [vmem:[%s599 + $0x8] sm:$0xff]
        %vm602 = vcmask 130048
        %v604 = vsel %vm602, %v596, 0
        %606 = vmatprep.subr.mxu0 0.0
        %607 = vmatpush1.msra.mxu0 %v600
        %608 = vmatprep.subr.mxu0 0.0
        %609 = vmatpush1.msra.mxu0 %v601
        %610 = vmatprep.subr.mxu0 0.0
        %611 = vmatpush1.msra.mxu0 0.0
        %612 = vmatprep.subr.mxu0 0.0
        %613 = vmatpush1.msra.mxu0 0.0
        %614 = vmatprep.subr.mxu0 0.0
        %615 = vmatpush1.msra.mxu0 0.0
        %616 = vmatprep.subr.mxu0 0.0
        %617 = vmatpush1.msra.mxu0 0.0
        %618 = vmatprep.subr.mxu0 0.0
        %619 = vmatpush1.msra.mxu0 0.0
        %620 = vmatprep.subr.mxu0 0.0
        %621 = vmatpush1.msra.mxu0 0.0
        %622 = vmatprep.subr.mxu0 0.0
        %623 = vmatpush1.msra.mxu0 0.0
        %624 = vmatprep.subr.mxu0 0.0
        %625 = vmatpush1.msra.mxu0 0.0
        %626 = vmatprep.subr.mxu0 0.0
        %627 = vmatpush1.msra.mxu0 0.0
        %628 = vmatprep.subr.mxu0 0.0
        %629 = vmatpush1.msra.mxu0 0.0
        %630 = vmatprep.subr.mxu0 0.0
        %631 = vmatpush1.msra.mxu0 0.0
        %632 = vmatprep.subr.mxu0 0.0
        %633 = vmatpush1.msra.mxu0 0.0
        %634 = vmatprep.subr.mxu0 0.0
        %635 = vmatpush1.msra.mxu0 0.0
        %636 = vmatprep.subr.mxu0 0.0
        %637 = vmatpush1.msra.mxu0 0.0
        %638 = vmatprep.subr.mxu0 0.0
        %639 = vmatpush1.msra.mxu0 0.0
        %640 = vmatprep.subr.mxu0 0.0
        %641 = vmatpush1.msra.mxu0 0.0
        %642 = vmatprep.subr.mxu0 0.0
        %643 = vmatpush1.msra.mxu0 0.0
        %644 = vmatprep.subr.mxu0 0.0
        %645 = vmatpush1.msra.mxu0 0.0
        %646 = vmatprep.subr.mxu0 0.0
        %647 = vmatpush1.msra.mxu0 0.0
        %648 = vmatprep.subr.mxu0 0.0
        %649 = vmatpush1.msra.mxu0 0.0
        %650 = vmatprep.subr.mxu0 0.0
        %651 = vmatpush1.msra.mxu0 0.0
        %652 = vmatprep.subr.mxu0 0.0
        %653 = vmatpush1.msra.mxu0 0.0
        %654 = vmatprep.subr.mxu0 0.0
        %655 = vmatpush1.msra.mxu0 0.0
        %656 = vmatprep.subr.mxu0 0.0
        %657 = vmatpush1.msra.mxu0 0.0
        %658 = vmatprep.subr.mxu0 0.0
        %659 = vmatpush1.msra.mxu0 0.0
        %660 = vmatprep.subr.mxu0 0.0
        %661 = vmatpush1.msra.mxu0 0.0
        %662 = vmatprep.subr.mxu0 0.0
        %663 = vmatpush1.msra.mxu0 0.0
        %664 = vmatprep.subr.mxu0 0.0
        %665 = vmatpush1.msra.mxu0 0.0
        %666 = vmatprep.subr.mxu0 0.0
        %667 = vmatpush1.msra.mxu0 0.0
        %668 = vmatprep.subr.mxu0 0.0
        %669 = vmatpush1.msra.mxu0 0.0
        %670 = vmatprep.mubr.f32.mxu0 0.0
        %671 = vmatmul.mubr.f32.gmra.mrb[0].mxu0 %v604
        %v672 = vpop.f32.mrb[0].mxu0
        %v673 = vadd.f32 0.0, %v672
        %v674 = vpop.f32.mrb[0].mxu0
        %675 = vdwg.mxu0
        %v677 = vsel %vm602, %v519, 0
        %679 = vmatprep.subr.mxu0 0.0
        %680 = vmatpush1.msra.mxu0 %v522
        %681 = vmatprep.subr.mxu0 0.0
        %682 = vmatpush1.msra.mxu0 %v523
        %683 = vmatprep.subr.mxu0 0.0
        %684 = vmatpush1.msra.mxu0 0.0
        %685 = vmatprep.subr.mxu0 0.0
        %686 = vmatpush1.msra.mxu0 0.0
        %687 = vmatprep.subr.mxu0 0.0
        %688 = vmatpush1.msra.mxu0 0.0
        %689 = vmatprep.subr.mxu0 0.0
        %690 = vmatpush1.msra.mxu0 0.0
        %691 = vmatprep.subr.mxu0 0.0
        %692 = vmatpush1.msra.mxu0 0.0
        %693 = vmatprep.subr.mxu0 0.0
        %694 = vmatpush1.msra.mxu0 0.0
        %695 = vmatprep.subr.mxu0 0.0
        %696 = vmatpush1.msra.mxu0 0.0
        %697 = vmatprep.subr.mxu0 0.0
        %698 = vmatpush1.msra.mxu0 0.0
        %699 = vmatprep.subr.mxu0 0.0
        %700 = vmatpush1.msra.mxu0 0.0
        %701 = vmatprep.subr.mxu0 0.0
        %702 = vmatpush1.msra.mxu0 0.0
        %703 = vmatprep.subr.mxu0 0.0
        %704 = vmatpush1.msra.mxu0 0.0
        %705 = vmatprep.subr.mxu0 0.0
        %706 = vmatpush1.msra.mxu0 0.0
        %707 = vmatprep.subr.mxu0 0.0
        %708 = vmatpush1.msra.mxu0 0.0
        %709 = vmatprep.subr.mxu0 0.0
        %710 = vmatpush1.msra.mxu0 0.0
        %711 = vmatprep.subr.mxu0 0.0
        %712 = vmatpush1.msra.mxu0 0.0
        %713 = vmatprep.subr.mxu0 0.0
        %714 = vmatpush1.msra.mxu0 0.0
        %715 = vmatprep.subr.mxu0 0.0
        %716 = vmatpush1.msra.mxu0 0.0
        %717 = vmatprep.subr.mxu0 0.0
        %718 = vmatpush1.msra.mxu0 0.0
        %719 = vmatprep.subr.mxu0 0.0
        %720 = vmatpush1.msra.mxu0 0.0
        %721 = vmatprep.subr.mxu0 0.0
        %722 = vmatpush1.msra.mxu0 0.0
        %723 = vmatprep.subr.mxu0 0.0
        %724 = vmatpush1.msra.mxu0 0.0
        %725 = vmatprep.subr.mxu0 0.0
        %726 = vmatpush1.msra.mxu0 0.0
        %727 = vmatprep.subr.mxu0 0.0
        %728 = vmatpush1.msra.mxu0 0.0
        %729 = vmatprep.subr.mxu0 0.0
        %730 = vmatpush1.msra.mxu0 0.0
        %731 = vmatprep.subr.mxu0 0.0
        %732 = vmatpush1.msra.mxu0 0.0
        %733 = vmatprep.subr.mxu0 0.0
        %734 = vmatpush1.msra.mxu0 0.0
        %735 = vmatprep.subr.mxu0 0.0
        %736 = vmatpush1.msra.mxu0 0.0
        %737 = vmatprep.subr.mxu0 0.0
        %738 = vmatpush1.msra.mxu0 0.0
        %739 = vmatprep.subr.mxu0 0.0
        %740 = vmatpush1.msra.mxu0 0.0
        %741 = vmatprep.subr.mxu0 0.0
        %742 = vmatpush1.msra.mxu0 0.0
        %743 = vmatprep.mubr.f32.mxu0 0.0
        %744 = vmatmul.mubr.f32.gmra.mrb[0].mxu0 %v677
        %v745 = vpop.f32.mrb[0].mxu0
        %v746 = vadd.f32 %v673, %v745
        %v747 = vpop.f32.mrb[0].mxu0
        %748 = vdwg.mxu0
        %s749 = scalar_lea.vmem %s2, 8
        %v750 = vld [vmem:[%s749] sm:$0xf]
        %v752 = vsel %vm444, %v750, 0
        %754 = vmatprep.subr.mxu0 0.0
        %755 = vmatpush1.msra.mxu0 %v450
        %756 = vmatprep.subr.mxu0 0.0
        %757 = vmatpush1.msra.mxu0 0.0
        %758 = vmatprep.subr.mxu0 0.0
        %759 = vmatpush1.msra.mxu0 0.0
        %760 = vmatprep.subr.mxu0 0.0
        %761 = vmatpush1.msra.mxu0 0.0
        %762 = vmatprep.subr.mxu0 0.0
        %763 = vmatpush1.msra.mxu0 0.0
        %764 = vmatprep.subr.mxu0 0.0
        %765 = vmatpush1.msra.mxu0 0.0
        %766 = vmatprep.subr.mxu0 0.0
        %767 = vmatpush1.msra.mxu0 0.0
        %768 = vmatprep.subr.mxu0 0.0
        %769 = vmatpush1.msra.mxu0 0.0
        %770 = vmatprep.subr.mxu0 0.0
        %771 = vmatpush1.msra.mxu0 0.0
        %772 = vmatprep.subr.mxu0 0.0
        %773 = vmatpush1.msra.mxu0 0.0
        %774 = vmatprep.subr.mxu0 0.0
        %775 = vmatpush1.msra.mxu0 0.0
        %776 = vmatprep.subr.mxu0 0.0
        %777 = vmatpush1.msra.mxu0 0.0
        %778 = vmatprep.subr.mxu0 0.0
        %779 = vmatpush1.msra.mxu0 0.0
        %780 = vmatprep.subr.mxu0 0.0
        %781 = vmatpush1.msra.mxu0 0.0
        %782 = vmatprep.subr.mxu0 0.0
        %783 = vmatpush1.msra.mxu0 0.0
        %784 = vmatprep.subr.mxu0 0.0
        %785 = vmatpush1.msra.mxu0 0.0
        %786 = vmatprep.subr.mxu0 0.0
        %787 = vmatpush1.msra.mxu0 0.0
        %788 = vmatprep.subr.mxu0 0.0
        %789 = vmatpush1.msra.mxu0 0.0
        %790 = vmatprep.subr.mxu0 0.0
        %791 = vmatpush1.msra.mxu0 0.0
        %792 = vmatprep.subr.mxu0 0.0
        %793 = vmatpush1.msra.mxu0 0.0
        %794 = vmatprep.subr.mxu0 0.0
        %795 = vmatpush1.msra.mxu0 0.0
        %796 = vmatprep.subr.mxu0 0.0
        %797 = vmatpush1.msra.mxu0 0.0
        %798 = vmatprep.subr.mxu0 0.0
        %799 = vmatpush1.msra.mxu0 0.0
        %800 = vmatprep.subr.mxu0 0.0
        %801 = vmatpush1.msra.mxu0 0.0
        %802 = vmatprep.subr.mxu0 0.0
        %803 = vmatpush1.msra.mxu0 0.0
        %804 = vmatprep.subr.mxu0 0.0
        %805 = vmatpush1.msra.mxu0 0.0
        %806 = vmatprep.subr.mxu0 0.0
        %807 = vmatpush1.msra.mxu0 0.0
        %808 = vmatprep.subr.mxu0 0.0
        %809 = vmatpush1.msra.mxu0 0.0
        %810 = vmatprep.subr.mxu0 0.0
        %811 = vmatpush1.msra.mxu0 0.0
        %812 = vmatprep.subr.mxu0 0.0
        %813 = vmatpush1.msra.mxu0 0.0
        %814 = vmatprep.subr.mxu0 0.0
        %815 = vmatpush1.msra.mxu0 0.0
        %816 = vmatprep.subr.mxu0 0.0
        %817 = vmatpush1.msra.mxu0 0.0
        %818 = vmatprep.mubr.f32.mxu0 0.0
        %819 = vmatmul.mubr.f32.gmra.mrb[0].mxu0 %v752
        %v820 = vpop.f32.mrb[0].mxu0
        %v821 = vadd.f32 0.0, %v820
        %v822 = vpop.f32.mrb[0].mxu0
        %823 = vdwg.mxu0
        %s824 = scalar_lea.vmem [#allocation7], 32
        %v825 = vld [vmem:[%s824] sm:$0xff]
        %v826 = vld [vmem:[%s824 + $0x8] sm:$0xff]
        %v828 = vsel %vm602, %v821, 0
        %830 = vmatprep.subr.mxu0 0.0
        %831 = vmatpush1.msra.mxu0 %v825
        %832 = vmatprep.subr.mxu0 0.0
        %833 = vmatpush1.msra.mxu0 %v826
        %834 = vmatprep.subr.mxu0 0.0
        %835 = vmatpush1.msra.mxu0 0.0
        %836 = vmatprep.subr.mxu0 0.0
        %837 = vmatpush1.msra.mxu0 0.0
        %838 = vmatprep.subr.mxu0 0.0
        %839 = vmatpush1.msra.mxu0 0.0
        %840 = vmatprep.subr.mxu0 0.0
        %841 = vmatpush1.msra.mxu0 0.0
        %842 = vmatprep.subr.mxu0 0.0
        %843 = vmatpush1.msra.mxu0 0.0
        %844 = vmatprep.subr.mxu0 0.0
        %845 = vmatpush1.msra.mxu0 0.0
        %846 = vmatprep.subr.mxu0 0.0
        %847 = vmatpush1.msra.mxu0 0.0
        %848 = vmatprep.subr.mxu0 0.0
        %849 = vmatpush1.msra.mxu0 0.0
        %850 = vmatprep.subr.mxu0 0.0
        %851 = vmatpush1.msra.mxu0 0.0
        %852 = vmatprep.subr.mxu0 0.0
        %853 = vmatpush1.msra.mxu0 0.0
        %854 = vmatprep.subr.mxu0 0.0
        %855 = vmatpush1.msra.mxu0 0.0
        %856 = vmatprep.subr.mxu0 0.0
        %857 = vmatpush1.msra.mxu0 0.0
        %858 = vmatprep.subr.mxu0 0.0
        %859 = vmatpush1.msra.mxu0 0.0
        %860 = vmatprep.subr.mxu0 0.0
        %861 = vmatpush1.msra.mxu0 0.0
        %862 = vmatprep.subr.mxu0 0.0
        %863 = vmatpush1.msra.mxu0 0.0
        %864 = vmatprep.subr.mxu0 0.0
        %865 = vmatpush1.msra.mxu0 0.0
        %866 = vmatprep.subr.mxu0 0.0
        %867 = vmatpush1.msra.mxu0 0.0
        %868 = vmatprep.subr.mxu0 0.0
        %869 = vmatpush1.msra.mxu0 0.0
        %870 = vmatprep.subr.mxu0 0.0
        %871 = vmatpush1.msra.mxu0 0.0
        %872 = vmatprep.subr.mxu0 0.0
        %873 = vmatpush1.msra.mxu0 0.0
        %874 = vmatprep.subr.mxu0 0.0
        %875 = vmatpush1.msra.mxu0 0.0
        %876 = vmatprep.subr.mxu0 0.0
        %877 = vmatpush1.msra.mxu0 0.0
        %878 = vmatprep.subr.mxu0 0.0
        %879 = vmatpush1.msra.mxu0 0.0
        %880 = vmatprep.subr.mxu0 0.0
        %881 = vmatpush1.msra.mxu0 0.0
        %882 = vmatprep.subr.mxu0 0.0
        %883 = vmatpush1.msra.mxu0 0.0
        %884 = vmatprep.subr.mxu0 0.0
        %885 = vmatpush1.msra.mxu0 0.0
        %886 = vmatprep.subr.mxu0 0.0
        %887 = vmatpush1.msra.mxu0 0.0
        %888 = vmatprep.subr.mxu0 0.0
        %889 = vmatpush1.msra.mxu0 0.0
        %890 = vmatprep.subr.mxu0 0.0
        %891 = vmatpush1.msra.mxu0 0.0
        %892 = vmatprep.subr.mxu0 0.0
        %893 = vmatpush1.msra.mxu0 0.0
        %894 = vmatprep.mubr.f32.mxu0 0.0
        %895 = vmatmul.mubr.f32.gmra.mrb[0].mxu0 %v828
        %v896 = vpop.f32.mrb[0].mxu0
        %v897 = vadd.f32 0.0, %v896
        %v898 = vpop.f32.mrb[0].mxu0
        %899 = vdwg.mxu0
        %v900 = vadd.f32 %v746, %v897
        %s901 = scalar_lea.vmem %s2, 12
        %v902 = vld [vmem:[%s901] sm:$0xf]
        %v904 = vsel %vm444, %v902, 0
        %906 = vmatprep.subr.mxu0 0.0
        %907 = vmatpush1.msra.mxu0 %v450
        %908 = vmatprep.subr.mxu0 0.0
        %909 = vmatpush1.msra.mxu0 0.0
        %910 = vmatprep.subr.mxu0 0.0
        %911 = vmatpush1.msra.mxu0 0.0
        %912 = vmatprep.subr.mxu0 0.0
        %913 = vmatpush1.msra.mxu0 0.0
        %914 = vmatprep.subr.mxu0 0.0
        %915 = vmatpush1.msra.mxu0 0.0
        %916 = vmatprep.subr.mxu0 0.0
        %917 = vmatpush1.msra.mxu0 0.0
        %918 = vmatprep.subr.mxu0 0.0
        %919 = vmatpush1.msra.mxu0 0.0
        %920 = vmatprep.subr.mxu0 0.0
        %921 = vmatpush1.msra.mxu0 0.0
        %922 = vmatprep.subr.mxu0 0.0
        %923 = vmatpush1.msra.mxu0 0.0
        %924 = vmatprep.subr.mxu0 0.0
        %925 = vmatpush1.msra.mxu0 0.0
        %926 = vmatprep.subr.mxu0 0.0
        %927 = vmatpush1.msra.mxu0 0.0
        %928 = vmatprep.subr.mxu0 0.0
        %929 = vmatpush1.msra.mxu0 0.0
        %930 = vmatprep.subr.mxu0 0.0
        %931 = vmatpush1.msra.mxu0 0.0
        %932 = vmatprep.subr.mxu0 0.0
        %933 = vmatpush1.msra.mxu0 0.0
        %934 = vmatprep.subr.mxu0 0.0
        %935 = vmatpush1.msra.mxu0 0.0
        %936 = vmatprep.subr.mxu0 0.0
        %937 = vmatpush1.msra.mxu0 0.0
        %938 = vmatprep.subr.mxu0 0.0
        %939 = vmatpush1.msra.mxu0 0.0
        %940 = vmatprep.subr.mxu0 0.0
        %941 = vmatpush1.msra.mxu0 0.0
        %942 = vmatprep.subr.mxu0 0.0
        %943 = vmatpush1.msra.mxu0 0.0
        %944 = vmatprep.subr.mxu0 0.0
        %945 = vmatpush1.msra.mxu0 0.0
        %946 = vmatprep.subr.mxu0 0.0
        %947 = vmatpush1.msra.mxu0 0.0
        %948 = vmatprep.subr.mxu0 0.0
        %949 = vmatpush1.msra.mxu0 0.0
        %950 = vmatprep.subr.mxu0 0.0
        %951 = vmatpush1.msra.mxu0 0.0
        %952 = vmatprep.subr.mxu0 0.0
        %953 = vmatpush1.msra.mxu0 0.0
        %954 = vmatprep.subr.mxu0 0.0
        %955 = vmatpush1.msra.mxu0 0.0
        %956 = vmatprep.subr.mxu0 0.0
        %957 = vmatpush1.msra.mxu0 0.0
        %958 = vmatprep.subr.mxu0 0.0
        %959 = vmatpush1.msra.mxu0 0.0
        %960 = vmatprep.subr.mxu0 0.0
        %961 = vmatpush1.msra.mxu0 0.0
        %962 = vmatprep.subr.mxu0 0.0
        %963 = vmatpush1.msra.mxu0 0.0
        %964 = vmatprep.subr.mxu0 0.0
        %965 = vmatpush1.msra.mxu0 0.0
        %966 = vmatprep.subr.mxu0 0.0
        %967 = vmatpush1.msra.mxu0 0.0
        %968 = vmatprep.subr.mxu0 0.0
        %969 = vmatpush1.msra.mxu0 0.0
        %970 = vmatprep.mubr.f32.mxu0 0.0
        %971 = vmatmul.mubr.f32.gmra.mrb[0].mxu0 %v904
        %v972 = vpop.f32.mrb[0].mxu0
        %v973 = vadd.f32 0.0, %v972
        %v974 = vpop.f32.mrb[0].mxu0
        %975 = vdwg.mxu0
        %s976 = scalar_lea.vmem [#allocation7], 48
        %v977 = vld [vmem:[%s976] sm:$0xff]
        %v978 = vld [vmem:[%s976 + $0x8] sm:$0xff]
        %v980 = vsel %vm602, %v973, 0
        %982 = vmatprep.subr.mxu0 0.0
        %983 = vmatpush1.msra.mxu0 %v977
        %984 = vmatprep.subr.mxu0 0.0
        %985 = vmatpush1.msra.mxu0 %v978
        %986 = vmatprep.subr.mxu0 0.0
        %987 = vmatpush1.msra.mxu0 0.0
        %988 = vmatprep.subr.mxu0 0.0
        %989 = vmatpush1.msra.mxu0 0.0
        %990 = vmatprep.subr.mxu0 0.0
        %991 = vmatpush1.msra.mxu0 0.0
        %992 = vmatprep.subr.mxu0 0.0
        %993 = vmatpush1.msra.mxu0 0.0
        %994 = vmatprep.subr.mxu0 0.0
        %995 = vmatpush1.msra.mxu0 0.0
        %996 = vmatprep.subr.mxu0 0.0
        %997 = vmatpush1.msra.mxu0 0.0
        %998 = vmatprep.subr.mxu0 0.0
        %999 = vmatpush1.msra.mxu0 0.0
        %1000 = vmatprep.subr.mxu0 0.0
        %1001 = vmatpush1.msra.mxu0 0.0
        %1002 = vmatprep.subr.mxu0 0.0
        %1003 = vmatpush1.msra.mxu0 0.0
        %1004 = vmatprep.subr.mxu0 0.0
        %1005 = vmatpush1.msra.mxu0 0.0
        %1006 = vmatprep.subr.mxu0 0.0
        %1007 = vmatpush1.msra.mxu0 0.0
        %1008 = vmatprep.subr.mxu0 0.0
        %1009 = vmatpush1.msra.mxu0 0.0
        %1010 = vmatprep.subr.mxu0 0.0
        %1011 = vmatpush1.msra.mxu0 0.0
        %1012 = vmatprep.subr.mxu0 0.0
        %1013 = vmatpush1.msra.mxu0 0.0
        %1014 = vmatprep.subr.mxu0 0.0
        %1015 = vmatpush1.msra.mxu0 0.0
        %1016 = vmatprep.subr.mxu0 0.0
        %1017 = vmatpush1.msra.mxu0 0.0
        %1018 = vmatprep.subr.mxu0 0.0
        %1019 = vmatpush1.msra.mxu0 0.0
        %1020 = vmatprep.subr.mxu0 0.0
        %1021 = vmatpush1.msra.mxu0 0.0
        %1022 = vmatprep.subr.mxu0 0.0
        %1023 = vmatpush1.msra.mxu0 0.0
        %1024 = vmatprep.subr.mxu0 0.0
        %1025 = vmatpush1.msra.mxu0 0.0
        %1026 = vmatprep.subr.mxu0 0.0
        %1027 = vmatpush1.msra.mxu0 0.0
        %1028 = vmatprep.subr.mxu0 0.0
        %1029 = vmatpush1.msra.mxu0 0.0
        %1030 = vmatprep.subr.mxu0 0.0
        %1031 = vmatpush1.msra.mxu0 0.0
        %1032 = vmatprep.subr.mxu0 0.0
        %1033 = vmatpush1.msra.mxu0 0.0
        %1034 = vmatprep.subr.mxu0 0.0
        %1035 = vmatpush1.msra.mxu0 0.0
        %1036 = vmatprep.subr.mxu0 0.0
        %1037 = vmatpush1.msra.mxu0 0.0
        %1038 = vmatprep.subr.mxu0 0.0
        %1039 = vmatpush1.msra.mxu0 0.0
        %1040 = vmatprep.subr.mxu0 0.0
        %1041 = vmatpush1.msra.mxu0 0.0
        %1042 = vmatprep.subr.mxu0 0.0
        %1043 = vmatpush1.msra.mxu0 0.0
        %1044 = vmatprep.subr.mxu0 0.0
        %1045 = vmatpush1.msra.mxu0 0.0
        %1046 = vmatprep.mubr.f32.mxu0 0.0
        %1047 = vmatmul.mubr.f32.gmra.mrb[0].mxu0 %v980
        %v1048 = vpop.f32.mrb[0].mxu0
        %v1049 = vadd.f32 0.0, %v1048
        %v1050 = vpop.f32.mrb[0].mxu0
        %1051 = vdwg.mxu0
        %v1052 = vadd.f32 %v900, %v1049
        %v1053 = vld [vmem:[%s4] sm:$0xf]
        %1055 = vset.pattern.permute.xlu0 0
        %1056 = vperm.xlu0 %1055, %v1053
        %v1057 = vpop.permute.xlu0 %1056
        %v1059 = vadd.f32 %v1052, %v1057
        %1061 = vrot.lane.b32.xlu0 %v442, 3
        %v1062 = vpop.permute.xlu0 %1061
        %vm1064 = vcmask 576536
        %1065 = vst.msk [vmem:[#allocation2] sm:$0xf] %vm1064, %v1062
        %v1067 = vrot.slane %v1059, 4
        %1068 = vrot.lane.b32.xlu0 %v1067, 5
        %v1069 = vpop.permute.xlu0 %1068
        %vm1071 = vcmask 564268
        %1072 = vst.msk [vmem:[#allocation2] sm:$0xf0] %vm1071, %v1069
        %v1073 = vld [vmem:[%s2] sm:$0xf]
        %1074 = vrot.lane.b32.xlu0 %v441, 112
        %v1075 = vpop.permute.xlu0 %1074
        %v1077 = vsel %vm444, %v1073, 0
        %v1079 = vsel %vm448, %v1075, 0
        %1081 = vmatprep.subr.mxu0 0.0
        %1082 = vmatpush1.msra.mxu0 %v1079
        %1083 = vmatprep.subr.mxu0 0.0
        %1084 = vmatpush1.msra.mxu0 0.0
        %1085 = vmatprep.subr.mxu0 0.0
        %1086 = vmatpush1.msra.mxu0 0.0
        %1087 = vmatprep.subr.mxu0 0.0
        %1088 = vmatpush1.msra.mxu0 0.0
        %1089 = vmatprep.subr.mxu0 0.0
        %1090 = vmatpush1.msra.mxu0 0.0
        %1091 = vmatprep.subr.mxu0 0.0
        %1092 = vmatpush1.msra.mxu0 0.0
        %1093 = vmatprep.subr.mxu0 0.0
        %1094 = vmatpush1.msra.mxu0 0.0
        %1095 = vmatprep.subr.mxu0 0.0
        %1096 = vmatpush1.msra.mxu0 0.0
        %1097 = vmatprep.subr.mxu0 0.0
        %1098 = vmatpush1.msra.mxu0 0.0
        %1099 = vmatprep.subr.mxu0 0.0
        %1100 = vmatpush1.msra.mxu0 0.0
        %1101 = vmatprep.subr.mxu0 0.0
        %1102 = vmatpush1.msra.mxu0 0.0
        %1103 = vmatprep.subr.mxu0 0.0
        %1104 = vmatpush1.msra.mxu0 0.0
        %1105 = vmatprep.subr.mxu0 0.0
        %1106 = vmatpush1.msra.mxu0 0.0
        %1107 = vmatprep.subr.mxu0 0.0
        %1108 = vmatpush1.msra.mxu0 0.0
        %1109 = vmatprep.subr.mxu0 0.0
        %1110 = vmatpush1.msra.mxu0 0.0
        %1111 = vmatprep.subr.mxu0 0.0
        %1112 = vmatpush1.msra.mxu0 0.0
        %1113 = vmatprep.subr.mxu0 0.0
        %1114 = vmatpush1.msra.mxu0 0.0
        %1115 = vmatprep.subr.mxu0 0.0
        %1116 = vmatpush1.msra.mxu0 0.0
        %1117 = vmatprep.subr.mxu0 0.0
        %1118 = vmatpush1.msra.mxu0 0.0
        %1119 = vmatprep.subr.mxu0 0.0
        %1120 = vmatpush1.msra.mxu0 0.0
        %1121 = vmatprep.subr.mxu0 0.0
        %1122 = vmatpush1.msra.mxu0 0.0
        %1123 = vmatprep.subr.mxu0 0.0
        %1124 = vmatpush1.msra.mxu0 0.0
        %1125 = vmatprep.subr.mxu0 0.0
        %1126 = vmatpush1.msra.mxu0 0.0
        %1127 = vmatprep.subr.mxu0 0.0
        %1128 = vmatpush1.msra.mxu0 0.0
        %1129 = vmatprep.subr.mxu0 0.0
        %1130 = vmatpush1.msra.mxu0 0.0
        %1131 = vmatprep.subr.mxu0 0.0
        %1132 = vmatpush1.msra.mxu0 0.0
        %1133 = vmatprep.subr.mxu0 0.0
        %1134 = vmatpush1.msra.mxu0 0.0
        %1135 = vmatprep.subr.mxu0 0.0
        %1136 = vmatpush1.msra.mxu0 0.0
        %1137 = vmatprep.subr.mxu0 0.0
        %1138 = vmatpush1.msra.mxu0 0.0
        %1139 = vmatprep.subr.mxu0 0.0
        %1140 = vmatpush1.msra.mxu0 0.0
        %1141 = vmatprep.subr.mxu0 0.0
        %1142 = vmatpush1.msra.mxu0 0.0
        %1143 = vmatprep.subr.mxu0 0.0
        %1144 = vmatpush1.msra.mxu0 0.0
        %1145 = vmatprep.mubr.f32.mxu0 0.0
        %1146 = vmatmul.mubr.f32.gmra.mrb[0].mxu0 %v1077
        %v1147 = vpop.f32.mrb[0].mxu0
        %v1148 = vadd.f32 0.0, %v1147
        %v1149 = vpop.f32.mrb[0].mxu0
        %1150 = vdwg.mxu0
        %v1151 = vld [vmem:[#allocation7] sm:$0xff]
        %v1152 = vld [vmem:[#allocation7 + $0x8] sm:$0xff]
        %v1153 = vld [vmem:[%s524] sm:$0xf]
        %v1155 = vsel %vm444, %v1153, 0
        %1157 = vmatprep.subr.mxu0 0.0
        %1158 = vmatpush1.msra.mxu0 %v1079
        %1159 = vmatprep.subr.mxu0 0.0
        %1160 = vmatpush1.msra.mxu0 0.0
        %1161 = vmatprep.subr.mxu0 0.0
        %1162 = vmatpush1.msra.mxu0 0.0
        %1163 = vmatprep.subr.mxu0 0.0
        %1164 = vmatpush1.msra.mxu0 0.0
        %1165 = vmatprep.subr.mxu0 0.0
        %1166 = vmatpush1.msra.mxu0 0.0
        %1167 = vmatprep.subr.mxu0 0.0
        %1168 = vmatpush1.msra.mxu0 0.0
        %1169 = vmatprep.subr.mxu0 0.0
        %1170 = vmatpush1.msra.mxu0 0.0
        %1171 = vmatprep.subr.mxu0 0.0
        %1172 = vmatpush1.msra.mxu0 0.0
        %1173 = vmatprep.subr.mxu0 0.0
        %1174 = vmatpush1.msra.mxu0 0.0
        %1175 = vmatprep.subr.mxu0 0.0
        %1176 = vmatpush1.msra.mxu0 0.0
        %1177 = vmatprep.subr.mxu0 0.0
        %1178 = vmatpush1.msra.mxu0 0.0
        %1179 = vmatprep.subr.mxu0 0.0
        %1180 = vmatpush1.msra.mxu0 0.0
        %1181 = vmatprep.subr.mxu0 0.0
        %1182 = vmatpush1.msra.mxu0 0.0
        %1183 = vmatprep.subr.mxu0 0.0
        %1184 = vmatpush1.msra.mxu0 0.0
        %1185 = vmatprep.subr.mxu0 0.0
        %1186 = vmatpush1.msra.mxu0 0.0
        %1187 = vmatprep.subr.mxu0 0.0
        %1188 = vmatpush1.msra.mxu0 0.0
        %1189 = vmatprep.subr.mxu0 0.0
        %1190 = vmatpush1.msra.mxu0 0.0
        %1191 = vmatprep.subr.mxu0 0.0
        %1192 = vmatpush1.msra.mxu0 0.0
        %1193 = vmatprep.subr.mxu0 0.0
        %1194 = vmatpush1.msra.mxu0 0.0
        %1195 = vmatprep.subr.mxu0 0.0
        %1196 = vmatpush1.msra.mxu0 0.0
        %1197 = vmatprep.subr.mxu0 0.0
        %1198 = vmatpush1.msra.mxu0 0.0
        %1199 = vmatprep.subr.mxu0 0.0
        %1200 = vmatpush1.msra.mxu0 0.0
        %1201 = vmatprep.subr.mxu0 0.0
        %1202 = vmatpush1.msra.mxu0 0.0
        %1203 = vmatprep.subr.mxu0 0.0
        %1204 = vmatpush1.msra.mxu0 0.0
        %1205 = vmatprep.subr.mxu0 0.0
        %1206 = vmatpush1.msra.mxu0 0.0
        %1207 = vmatprep.subr.mxu0 0.0
        %1208 = vmatpush1.msra.mxu0 0.0
        %1209 = vmatprep.subr.mxu0 0.0
        %1210 = vmatpush1.msra.mxu0 0.0
        %1211 = vmatprep.subr.mxu0 0.0
        %1212 = vmatpush1.msra.mxu0 0.0
        %1213 = vmatprep.subr.mxu0 0.0
        %1214 = vmatpush1.msra.mxu0 0.0
        %1215 = vmatprep.subr.mxu0 0.0
        %1216 = vmatpush1.msra.mxu0 0.0
        %1217 = vmatprep.subr.mxu0 0.0
        %1218 = vmatpush1.msra.mxu0 0.0
        %1219 = vmatprep.subr.mxu0 0.0
        %1220 = vmatpush1.msra.mxu0 0.0
        %1221 = vmatprep.mubr.f32.mxu0 0.0
        %1222 = vmatmul.mubr.f32.gmra.mrb[0].mxu0 %v1155
        %v1223 = vpop.f32.mrb[0].mxu0
        %v1224 = vadd.f32 0.0, %v1223
        %v1225 = vpop.f32.mrb[0].mxu0
        %1226 = vdwg.mxu0
        %v1227 = vld [vmem:[%s599] sm:$0xff]
        %v1228 = vld [vmem:[%s599 + $0x8] sm:$0xff]
        %v1230 = vsel %vm602, %v1224, 0
        %1232 = vmatprep.subr.mxu0 0.0
        %1233 = vmatpush1.msra.mxu0 %v1227
        %1234 = vmatprep.subr.mxu0 0.0
        %1235 = vmatpush1.msra.mxu0 %v1228
        %1236 = vmatprep.subr.mxu0 0.0
        %1237 = vmatpush1.msra.mxu0 0.0
        %1238 = vmatprep.subr.mxu0 0.0
        %1239 = vmatpush1.msra.mxu0 0.0
        %1240 = vmatprep.subr.mxu0 0.0
        %1241 = vmatpush1.msra.mxu0 0.0
        %1242 = vmatprep.subr.mxu0 0.0
        %1243 = vmatpush1.msra.mxu0 0.0
        %1244 = vmatprep.subr.mxu0 0.0
        %1245 = vmatpush1.msra.mxu0 0.0
        %1246 = vmatprep.subr.mxu0 0.0
        %1247 = vmatpush1.msra.mxu0 0.0
        %1248 = vmatprep.subr.mxu0 0.0
        %1249 = vmatpush1.msra.mxu0 0.0
        %1250 = vmatprep.subr.mxu0 0.0
        %1251 = vmatpush1.msra.mxu0 0.0
        %1252 = vmatprep.subr.mxu0 0.0
        %1253 = vmatpush1.msra.mxu0 0.0
        %1254 = vmatprep.subr.mxu0 0.0
        %1255 = vmatpush1.msra.mxu0 0.0
        %1256 = vmatprep.subr.mxu0 0.0
        %1257 = vmatpush1.msra.mxu0 0.0
        %1258 = vmatprep.subr.mxu0 0.0
        %1259 = vmatpush1.msra.mxu0 0.0
        %1260 = vmatprep.subr.mxu0 0.0
        %1261 = vmatpush1.msra.mxu0 0.0
        %1262 = vmatprep.subr.mxu0 0.0
        %1263 = vmatpush1.msra.mxu0 0.0
        %1264 = vmatprep.subr.mxu0 0.0
        %1265 = vmatpush1.msra.mxu0 0.0
        %1266 = vmatprep.subr.mxu0 0.0
        %1267 = vmatpush1.msra.mxu0 0.0
        %1268 = vmatprep.subr.mxu0 0.0
        %1269 = vmatpush1.msra.mxu0 0.0
        %1270 = vmatprep.subr.mxu0 0.0
        %1271 = vmatpush1.msra.mxu0 0.0
        %1272 = vmatprep.subr.mxu0 0.0
        %1273 = vmatpush1.msra.mxu0 0.0
        %1274 = vmatprep.subr.mxu0 0.0
        %1275 = vmatpush1.msra.mxu0 0.0
        %1276 = vmatprep.subr.mxu0 0.0
        %1277 = vmatpush1.msra.mxu0 0.0
        %1278 = vmatprep.subr.mxu0 0.0
        %1279 = vmatpush1.msra.mxu0 0.0
        %1280 = vmatprep.subr.mxu0 0.0
        %1281 = vmatpush1.msra.mxu0 0.0
        %1282 = vmatprep.subr.mxu0 0.0
        %1283 = vmatpush1.msra.mxu0 0.0
        %1284 = vmatprep.subr.mxu0 0.0
        %1285 = vmatpush1.msra.mxu0 0.0
        %1286 = vmatprep.subr.mxu0 0.0
        %1287 = vmatpush1.msra.mxu0 0.0
        %1288 = vmatprep.subr.mxu0 0.0
        %1289 = vmatpush1.msra.mxu0 0.0
        %1290 = vmatprep.subr.mxu0 0.0
        %1291 = vmatpush1.msra.mxu0 0.0
        %1292 = vmatprep.subr.mxu0 0.0
        %1293 = vmatpush1.msra.mxu0 0.0
        %1294 = vmatprep.subr.mxu0 0.0
        %1295 = vmatpush1.msra.mxu0 0.0
        %1296 = vmatprep.mubr.f32.mxu0 0.0
        %1297 = vmatmul.mubr.f32.gmra.mrb[0].mxu0 %v1230
        %v1298 = vpop.f32.mrb[0].mxu0
        %v1299 = vadd.f32 0.0, %v1298
        %v1300 = vpop.f32.mrb[0].mxu0
        %1301 = vdwg.mxu0
        %v1303 = vsel %vm602, %v1148, 0
        %1305 = vmatprep.subr.mxu0 0.0
        %1306 = vmatpush1.msra.mxu0 %v1151
        %1307 = vmatprep.subr.mxu0 0.0
        %1308 = vmatpush1.msra.mxu0 %v1152
        %1309 = vmatprep.subr.mxu0 0.0
        %1310 = vmatpush1.msra.mxu0 0.0
        %1311 = vmatprep.subr.mxu0 0.0
        %1312 = vmatpush1.msra.mxu0 0.0
        %1313 = vmatprep.subr.mxu0 0.0
        %1314 = vmatpush1.msra.mxu0 0.0
        %1315 = vmatprep.subr.mxu0 0.0
        %1316 = vmatpush1.msra.mxu0 0.0
        %1317 = vmatprep.subr.mxu0 0.0
        %1318 = vmatpush1.msra.mxu0 0.0
        %1319 = vmatprep.subr.mxu0 0.0
        %1320 = vmatpush1.msra.mxu0 0.0
        %1321 = vmatprep.subr.mxu0 0.0
        %1322 = vmatpush1.msra.mxu0 0.0
        %1323 = vmatprep.subr.mxu0 0.0
        %1324 = vmatpush1.msra.mxu0 0.0
        %1325 = vmatprep.subr.mxu0 0.0
        %1326 = vmatpush1.msra.mxu0 0.0
        %1327 = vmatprep.subr.mxu0 0.0
        %1328 = vmatpush1.msra.mxu0 0.0
        %1329 = vmatprep.subr.mxu0 0.0
        %1330 = vmatpush1.msra.mxu0 0.0
        %1331 = vmatprep.subr.mxu0 0.0
        %1332 = vmatpush1.msra.mxu0 0.0
        %1333 = vmatprep.subr.mxu0 0.0
        %1334 = vmatpush1.msra.mxu0 0.0
        %1335 = vmatprep.subr.mxu0 0.0
        %1336 = vmatpush1.msra.mxu0 0.0
        %1337 = vmatprep.subr.mxu0 0.0
        %1338 = vmatpush1.msra.mxu0 0.0
        %1339 = vmatprep.subr.mxu0 0.0
        %1340 = vmatpush1.msra.mxu0 0.0
        %1341 = vmatprep.subr.mxu0 0.0
        %1342 = vmatpush1.msra.mxu0 0.0
        %1343 = vmatprep.subr.mxu0 0.0
        %1344 = vmatpush1.msra.mxu0 0.0
        %1345 = vmatprep.subr.mxu0 0.0
        %1346 = vmatpush1.msra.mxu0 0.0
        %1347 = vmatprep.subr.mxu0 0.0
        %1348 = vmatpush1.msra.mxu0 0.0
        %1349 = vmatprep.subr.mxu0 0.0
        %1350 = vmatpush1.msra.mxu0 0.0
        %1351 = vmatprep.subr.mxu0 0.0
        %1352 = vmatpush1.msra.mxu0 0.0
        %1353 = vmatprep.subr.mxu0 0.0
        %1354 = vmatpush1.msra.mxu0 0.0
        %1355 = vmatprep.subr.mxu0 0.0
        %1356 = vmatpush1.msra.mxu0 0.0
        %1357 = vmatprep.subr.mxu0 0.0
        %1358 = vmatpush1.msra.mxu0 0.0
        %1359 = vmatprep.subr.mxu0 0.0
        %1360 = vmatpush1.msra.mxu0 0.0
        %1361 = vmatprep.subr.mxu0 0.0
        %1362 = vmatpush1.msra.mxu0 0.0
        %1363 = vmatprep.subr.mxu0 0.0
        %1364 = vmatpush1.msra.mxu0 0.0
        %1365 = vmatprep.subr.mxu0 0.0
        %1366 = vmatpush1.msra.mxu0 0.0
        %1367 = vmatprep.subr.mxu0 0.0
        %1368 = vmatpush1.msra.mxu0 0.0
        %1369 = vmatprep.mubr.f32.mxu0 0.0
        %1370 = vmatmul.mubr.f32.gmra.mrb[0].mxu0 %v1303
        %v1371 = vpop.f32.mrb[0].mxu0
        %v1372 = vadd.f32 %v1299, %v1371
        %v1373 = vpop.f32.mrb[0].mxu0
        %1374 = vdwg.mxu0
        %v1375 = vld [vmem:[%s749] sm:$0xf]
        %v1377 = vsel %vm444, %v1375, 0
        %1379 = vmatprep.subr.mxu0 0.0
        %1380 = vmatpush1.msra.mxu0 %v1079
        %1381 = vmatprep.subr.mxu0 0.0
        %1382 = vmatpush1.msra.mxu0 0.0
        %1383 = vmatprep.subr.mxu0 0.0
        %1384 = vmatpush1.msra.mxu0 0.0
        %1385 = vmatprep.subr.mxu0 0.0
        %1386 = vmatpush1.msra.mxu0 0.0
        %1387 = vmatprep.subr.mxu0 0.0
        %1388 = vmatpush1.msra.mxu0 0.0
        %1389 = vmatprep.subr.mxu0 0.0
        %1390 = vmatpush1.msra.mxu0 0.0
        %1391 = vmatprep.subr.mxu0 0.0
        %1392 = vmatpush1.msra.mxu0 0.0
        %1393 = vmatprep.subr.mxu0 0.0
        %1394 = vmatpush1.msra.mxu0 0.0
        %1395 = vmatprep.subr.mxu0 0.0
        %1396 = vmatpush1.msra.mxu0 0.0
        %1397 = vmatprep.subr.mxu0 0.0
        %1398 = vmatpush1.msra.mxu0 0.0
        %1399 = vmatprep.subr.mxu0 0.0
        %1400 = vmatpush1.msra.mxu0 0.0
        %1401 = vmatprep.subr.mxu0 0.0
        %1402 = vmatpush1.msra.mxu0 0.0
        %1403 = vmatprep.subr.mxu0 0.0
        %1404 = vmatpush1.msra.mxu0 0.0
        %1405 = vmatprep.subr.mxu0 0.0
        %1406 = vmatpush1.msra.mxu0 0.0
        %1407 = vmatprep.subr.mxu0 0.0
        %1408 = vmatpush1.msra.mxu0 0.0
        %1409 = vmatprep.subr.mxu0 0.0
        %1410 = vmatpush1.msra.mxu0 0.0
        %1411 = vmatprep.subr.mxu0 0.0
        %1412 = vmatpush1.msra.mxu0 0.0
        %1413 = vmatprep.subr.mxu0 0.0
        %1414 = vmatpush1.msra.mxu0 0.0
        %1415 = vmatprep.subr.mxu0 0.0
        %1416 = vmatpush1.msra.mxu0 0.0
        %1417 = vmatprep.subr.mxu0 0.0
        %1418 = vmatpush1.msra.mxu0 0.0
        %1419 = vmatprep.subr.mxu0 0.0
        %1420 = vmatpush1.msra.mxu0 0.0
        %1421 = vmatprep.subr.mxu0 0.0
        %1422 = vmatpush1.msra.mxu0 0.0
        %1423 = vmatprep.subr.mxu0 0.0
        %1424 = vmatpush1.msra.mxu0 0.0
        %1425 = vmatprep.subr.mxu0 0.0
        %1426 = vmatpush1.msra.mxu0 0.0
        %1427 = vmatprep.subr.mxu0 0.0
        %1428 = vmatpush1.msra.mxu0 0.0
        %1429 = vmatprep.subr.mxu0 0.0
        %1430 = vmatpush1.msra.mxu0 0.0
        %1431 = vmatprep.subr.mxu0 0.0
        %1432 = vmatpush1.msra.mxu0 0.0
        %1433 = vmatprep.subr.mxu0 0.0
        %1434 = vmatpush1.msra.mxu0 0.0
        %1435 = vmatprep.subr.mxu0 0.0
        %1436 = vmatpush1.msra.mxu0 0.0
        %1437 = vmatprep.subr.mxu0 0.0
        %1438 = vmatpush1.msra.mxu0 0.0
        %1439 = vmatprep.subr.mxu0 0.0
        %1440 = vmatpush1.msra.mxu0 0.0
        %1441 = vmatprep.subr.mxu0 0.0
        %1442 = vmatpush1.msra.mxu0 0.0
        %1443 = vmatprep.mubr.f32.mxu0 0.0
        %1444 = vmatmul.mubr.f32.gmra.mrb[0].mxu0 %v1377
        %v1445 = vpop.f32.mrb[0].mxu0
        %v1446 = vadd.f32 0.0, %v1445
        %v1447 = vpop.f32.mrb[0].mxu0
        %1448 = vdwg.mxu0
        %v1449 = vld [vmem:[%s824] sm:$0xff]
        %v1450 = vld [vmem:[%s824 + $0x8] sm:$0xff]
        %v1452 = vsel %vm602, %v1446, 0
        %1454 = vmatprep.subr.mxu0 0.0
        %1455 = vmatpush1.msra.mxu0 %v1449
        %1456 = vmatprep.subr.mxu0 0.0
        %1457 = vmatpush1.msra.mxu0 %v1450
        %1458 = vmatprep.subr.mxu0 0.0
        %1459 = vmatpush1.msra.mxu0 0.0
        %1460 = vmatprep.subr.mxu0 0.0
        %1461 = vmatpush1.msra.mxu0 0.0
        %1462 = vmatprep.subr.mxu0 0.0
        %1463 = vmatpush1.msra.mxu0 0.0
        %1464 = vmatprep.subr.mxu0 0.0
        %1465 = vmatpush1.msra.mxu0 0.0
        %1466 = vmatprep.subr.mxu0 0.0
        %1467 = vmatpush1.msra.mxu0 0.0
        %1468 = vmatprep.subr.mxu0 0.0
        %1469 = vmatpush1.msra.mxu0 0.0
        %1470 = vmatprep.subr.mxu0 0.0
        %1471 = vmatpush1.msra.mxu0 0.0
        %1472 = vmatprep.subr.mxu0 0.0
        %1473 = vmatpush1.msra.mxu0 0.0
        %1474 = vmatprep.subr.mxu0 0.0
        %1475 = vmatpush1.msra.mxu0 0.0
        %1476 = vmatprep.subr.mxu0 0.0
        %1477 = vmatpush1.msra.mxu0 0.0
        %1478 = vmatprep.subr.mxu0 0.0
        %1479 = vmatpush1.msra.mxu0 0.0
        %1480 = vmatprep.subr.mxu0 0.0
        %1481 = vmatpush1.msra.mxu0 0.0
        %1482 = vmatprep.subr.mxu0 0.0
        %1483 = vmatpush1.msra.mxu0 0.0
        %1484 = vmatprep.subr.mxu0 0.0
        %1485 = vmatpush1.msra.mxu0 0.0
        %1486 = vmatprep.subr.mxu0 0.0
        %1487 = vmatpush1.msra.mxu0 0.0
        %1488 = vmatprep.subr.mxu0 0.0
        %1489 = vmatpush1.msra.mxu0 0.0
        %1490 = vmatprep.subr.mxu0 0.0
        %1491 = vmatpush1.msra.mxu0 0.0
        %1492 = vmatprep.subr.mxu0 0.0
        %1493 = vmatpush1.msra.mxu0 0.0
        %1494 = vmatprep.subr.mxu0 0.0
        %1495 = vmatpush1.msra.mxu0 0.0
        %1496 = vmatprep.subr.mxu0 0.0
        %1497 = vmatpush1.msra.mxu0 0.0
        %1498 = vmatprep.subr.mxu0 0.0
        %1499 = vmatpush1.msra.mxu0 0.0
        %1500 = vmatprep.subr.mxu0 0.0
        %1501 = vmatpush1.msra.mxu0 0.0
        %1502 = vmatprep.subr.mxu0 0.0
        %1503 = vmatpush1.msra.mxu0 0.0
        %1504 = vmatprep.subr.mxu0 0.0
        %1505 = vmatpush1.msra.mxu0 0.0
        %1506 = vmatprep.subr.mxu0 0.0
        %1507 = vmatpush1.msra.mxu0 0.0
        %1508 = vmatprep.subr.mxu0 0.0
        %1509 = vmatpush1.msra.mxu0 0.0
        %1510 = vmatprep.subr.mxu0 0.0
        %1511 = vmatpush1.msra.mxu0 0.0
        %1512 = vmatprep.subr.mxu0 0.0
        %1513 = vmatpush1.msra.mxu0 0.0
        %1514 = vmatprep.subr.mxu0 0.0
        %1515 = vmatpush1.msra.mxu0 0.0
        %1516 = vmatprep.subr.mxu0 0.0
        %1517 = vmatpush1.msra.mxu0 0.0
        %1518 = vmatprep.mubr.f32.mxu0 0.0
        %1519 = vmatmul.mubr.f32.gmra.mrb[0].mxu0 %v1452
        %v1520 = vpop.f32.mrb[0].mxu0
        %v1521 = vadd.f32 0.0, %v1520
        %v1522 = vpop.f32.mrb[0].mxu0
        %1523 = vdwg.mxu0
        %v1524 = vadd.f32 %v1372, %v1521
        %v1525 = vld [vmem:[%s901] sm:$0xf]
        %v1527 = vsel %vm444, %v1525, 0
        %1529 = vmatprep.subr.mxu0 0.0
        %1530 = vmatpush1.msra.mxu0 %v1079
        %1531 = vmatprep.subr.mxu0 0.0
        %1532 = vmatpush1.msra.mxu0 0.0
        %1533 = vmatprep.subr.mxu0 0.0
        %1534 = vmatpush1.msra.mxu0 0.0
        %1535 = vmatprep.subr.mxu0 0.0
        %1536 = vmatpush1.msra.mxu0 0.0
        %1537 = vmatprep.subr.mxu0 0.0
        %1538 = vmatpush1.msra.mxu0 0.0
        %1539 = vmatprep.subr.mxu0 0.0
        %1540 = vmatpush1.msra.mxu0 0.0
        %1541 = vmatprep.subr.mxu0 0.0
        %1542 = vmatpush1.msra.mxu0 0.0
        %1543 = vmatprep.subr.mxu0 0.0
        %1544 = vmatpush1.msra.mxu0 0.0
        %1545 = vmatprep.subr.mxu0 0.0
        %1546 = vmatpush1.msra.mxu0 0.0
        %1547 = vmatprep.subr.mxu0 0.0
        %1548 = vmatpush1.msra.mxu0 0.0
        %1549 = vmatprep.subr.mxu0 0.0
        %1550 = vmatpush1.msra.mxu0 0.0
        %1551 = vmatprep.subr.mxu0 0.0
        %1552 = vmatpush1.msra.mxu0 0.0
        %1553 = vmatprep.subr.mxu0 0.0
        %1554 = vmatpush1.msra.mxu0 0.0
        %1555 = vmatprep.subr.mxu0 0.0
        %1556 = vmatpush1.msra.mxu0 0.0
        %1557 = vmatprep.subr.mxu0 0.0
        %1558 = vmatpush1.msra.mxu0 0.0
        %1559 = vmatprep.subr.mxu0 0.0
        %1560 = vmatpush1.msra.mxu0 0.0
        %1561 = vmatprep.subr.mxu0 0.0
        %1562 = vmatpush1.msra.mxu0 0.0
        %1563 = vmatprep.subr.mxu0 0.0
        %1564 = vmatpush1.msra.mxu0 0.0
        %1565 = vmatprep.subr.mxu0 0.0
        %1566 = vmatpush1.msra.mxu0 0.0
        %1567 = vmatprep.subr.mxu0 0.0
        %1568 = vmatpush1.msra.mxu0 0.0
        %1569 = vmatprep.subr.mxu0 0.0
        %1570 = vmatpush1.msra.mxu0 0.0
        %1571 = vmatprep.subr.mxu0 0.0
        %1572 = vmatpush1.msra.mxu0 0.0
        %1573 = vmatprep.subr.mxu0 0.0
        %1574 = vmatpush1.msra.mxu0 0.0
        %1575 = vmatprep.subr.mxu0 0.0
        %1576 = vmatpush1.msra.mxu0 0.0
        %1577 = vmatprep.subr.mxu0 0.0
        %1578 = vmatpush1.msra.mxu0 0.0
        %1579 = vmatprep.subr.mxu0 0.0
        %1580 = vmatpush1.msra.mxu0 0.0
        %1581 = vmatprep.subr.mxu0 0.0
        %1582 = vmatpush1.msra.mxu0 0.0
        %1583 = vmatprep.subr.mxu0 0.0
        %1584 = vmatpush1.msra.mxu0 0.0
        %1585 = vmatprep.subr.mxu0 0.0
        %1586 = vmatpush1.msra.mxu0 0.0
        %1587 = vmatprep.subr.mxu0 0.0
        %1588 = vmatpush1.msra.mxu0 0.0
        %1589 = vmatprep.subr.mxu0 0.0
        %1590 = vmatpush1.msra.mxu0 0.0
        %1591 = vmatprep.subr.mxu0 0.0
        %1592 = vmatpush1.msra.mxu0 0.0
        %1593 = vmatprep.mubr.f32.mxu0 0.0
        %1594 = vmatmul.mubr.f32.gmra.mrb[0].mxu0 %v1527
        %v1595 = vpop.f32.mrb[0].mxu0
        %v1596 = vadd.f32 0.0, %v1595
        %v1597 = vpop.f32.mrb[0].mxu0
        %1598 = vdwg.mxu0
        %v1599 = vld [vmem:[%s976] sm:$0xff]
        %v1600 = vld [vmem:[%s976 + $0x8] sm:$0xff]
        %v1602 = vsel %vm602, %v1596, 0
        %1604 = vmatprep.subr.mxu0 0.0
        %1605 = vmatpush1.msra.mxu0 %v1599
        %1606 = vmatprep.subr.mxu0 0.0
        %1607 = vmatpush1.msra.mxu0 %v1600
        %1608 = vmatprep.subr.mxu0 0.0
        %1609 = vmatpush1.msra.mxu0 0.0
        %1610 = vmatprep.subr.mxu0 0.0
        %1611 = vmatpush1.msra.mxu0 0.0
        %1612 = vmatprep.subr.mxu0 0.0
        %1613 = vmatpush1.msra.mxu0 0.0
        %1614 = vmatprep.subr.mxu0 0.0
        %1615 = vmatpush1.msra.mxu0 0.0
        %1616 = vmatprep.subr.mxu0 0.0
        %1617 = vmatpush1.msra.mxu0 0.0
        %1618 = vmatprep.subr.mxu0 0.0
        %1619 = vmatpush1.msra.mxu0 0.0
        %1620 = vmatprep.subr.mxu0 0.0
        %1621 = vmatpush1.msra.mxu0 0.0
        %1622 = vmatprep.subr.mxu0 0.0
        %1623 = vmatpush1.msra.mxu0 0.0
        %1624 = vmatprep.subr.mxu0 0.0
        %1625 = vmatpush1.msra.mxu0 0.0
        %1626 = vmatprep.subr.mxu0 0.0
        %1627 = vmatpush1.msra.mxu0 0.0
        %1628 = vmatprep.subr.mxu0 0.0
        %1629 = vmatpush1.msra.mxu0 0.0
        %1630 = vmatprep.subr.mxu0 0.0
        %1631 = vmatpush1.msra.mxu0 0.0
        %1632 = vmatprep.subr.mxu0 0.0
        %1633 = vmatpush1.msra.mxu0 0.0
        %1634 = vmatprep.subr.mxu0 0.0
        %1635 = vmatpush1.msra.mxu0 0.0
        %1636 = vmatprep.subr.mxu0 0.0
        %1637 = vmatpush1.msra.mxu0 0.0
        %1638 = vmatprep.subr.mxu0 0.0
        %1639 = vmatpush1.msra.mxu0 0.0
        %1640 = vmatprep.subr.mxu0 0.0
        %1641 = vmatpush1.msra.mxu0 0.0
        %1642 = vmatprep.subr.mxu0 0.0
        %1643 = vmatpush1.msra.mxu0 0.0
        %1644 = vmatprep.subr.mxu0 0.0
        %1645 = vmatpush1.msra.mxu0 0.0
        %1646 = vmatprep.subr.mxu0 0.0
        %1647 = vmatpush1.msra.mxu0 0.0
        %1648 = vmatprep.subr.mxu0 0.0
        %1649 = vmatpush1.msra.mxu0 0.0
        %1650 = vmatprep.subr.mxu0 0.0
        %1651 = vmatpush1.msra.mxu0 0.0
        %1652 = vmatprep.subr.mxu0 0.0
        %1653 = vmatpush1.msra.mxu0 0.0
        %1654 = vmatprep.subr.mxu0 0.0
        %1655 = vmatpush1.msra.mxu0 0.0
        %1656 = vmatprep.subr.mxu0 0.0
        %1657 = vmatpush1.msra.mxu0 0.0
        %1658 = vmatprep.subr.mxu0 0.0
        %1659 = vmatpush1.msra.mxu0 0.0
        %1660 = vmatprep.subr.mxu0 0.0
        %1661 = vmatpush1.msra.mxu0 0.0
        %1662 = vmatprep.subr.mxu0 0.0
        %1663 = vmatpush1.msra.mxu0 0.0
        %1664 = vmatprep.subr.mxu0 0.0
        %1665 = vmatpush1.msra.mxu0 0.0
        %1666 = vmatprep.subr.mxu0 0.0
        %1667 = vmatpush1.msra.mxu0 0.0
        %1668 = vmatprep.mubr.f32.mxu0 0.0
        %1669 = vmatmul.mubr.f32.gmra.mrb[0].mxu0 %v1602
        %v1670 = vpop.f32.mrb[0].mxu0
        %v1671 = vadd.f32 0.0, %v1670
        %v1672 = vpop.f32.mrb[0].mxu0
        %1673 = vdwg.mxu0
        %v1674 = vadd.f32 %v1524, %v1671
        %v1675 = vld [vmem:[%s4] sm:$0xf]
        %1677 = vset.pattern.permute.xlu0 0
        %1678 = vperm.xlu0 %1677, %v1675
        %v1679 = vpop.permute.xlu0 %1678
        %v1681 = vadd.f32 %v1674, %v1679
        %v1682 = vcombine.high %v442, %v442
        %1683 = vrot.lane.b32.xlu0 %v442, 63
        %v1684 = vpop.permute.xlu0 %1683
        %1685 = vrot.lane.b32.xlu0 %v1682, 63
        %v1686 = vpop.permute.xlu0 %1685
        %vm1687 = vcmask 515072
        %v1688 = vsel %vm1687, %v1684, %v1686
        %1690 = vst.msk [vmem:[#allocation2 + $0x8] sm:$0xf] %vm1064, %v1688
        %v1692 = vrot.slane %v1681, 4
        %1693 = vrot.lane.b32.xlu0 %v1692, 5
        %v1694 = vpop.permute.xlu0 %1693
        %1696 = vst.msk [vmem:[#allocation2 + $0x8] sm:$0xf0] %vm1071, %v1694
        %v1697 = vld [vmem:[#allocation2] sm:$0xff]
        %v1698 = vld [vmem:[#allocation2 + $0x8] sm:$0xff]
        %1701 = vrot.lane.b32.xlu0 %v1697, 127
        %v1702 = vpop.permute.xlu0 %1701
        %1703 = vrot.lane.b32.xlu0 %v1698, 127
        %v1704 = vpop.permute.xlu0 %1703
        %vm1705 = vcmask 1039360
        %v1706 = vsel %vm1705, %v1702, %v1704
        %1709 = vrot.lane.b32.xlu0 %v1697, 126
        %v1710 = vpop.permute.xlu0 %1709
        %1711 = vrot.lane.b32.xlu0 %v1698, 126
        %v1712 = vpop.permute.xlu0 %1711
        %vm1713 = vcmask 1031168
        %v1714 = vsel %vm1713, %v1710, %v1712
        %1717 = vrot.lane.b32.xlu0 %v1697, 125
        %v1718 = vpop.permute.xlu0 %1717
        %1719 = vrot.lane.b32.xlu0 %v1698, 125
        %v1720 = vpop.permute.xlu0 %1719
        %vm1721 = vcmask 1022976
        %v1722 = vsel %vm1721, %v1718, %v1720
        %1725 = vrot.lane.b32.xlu0 %v1697, 124
        %v1726 = vpop.permute.xlu0 %1725
        %1727 = vrot.lane.b32.xlu0 %v1698, 124
        %v1728 = vpop.permute.xlu0 %1727
        %vm1729 = vcmask 1014784
        %v1730 = vsel %vm1729, %v1726, %v1728
        %1733 = vrot.lane.b32.xlu0 %v1697, 123
        %v1734 = vpop.permute.xlu0 %1733
        %1735 = vrot.lane.b32.xlu0 %v1698, 123
        %v1736 = vpop.permute.xlu0 %1735
        %vm1737 = vcmask 1006592
        %v1738 = vsel %vm1737, %v1734, %v1736
        %1741 = vrot.lane.b32.xlu0 %v1697, 122
        %v1742 = vpop.permute.xlu0 %1741
        %1743 = vrot.lane.b32.xlu0 %v1698, 122
        %v1744 = vpop.permute.xlu0 %1743
        %vm1745 = vcmask 998400
        %v1746 = vsel %vm1745, %v1742, %v1744
        %v1749 = vld [vmem:[%s5] sm:$0xf]
        %vm1750 = vcmask 457728
        %v1752 = vsel %vm1750, %v1749, 0
        %1754 = vmatprep.subr.mxu0 %v1698
        %1755 = vmatpush1.msra.mxu0 %v1697
        %1756 = vmatprep.subr.mxu0 %v1704
        %1757 = vmatpush1.msra.mxu0 %v1706
        %1758 = vmatprep.subr.mxu0 %v1712
        %1759 = vmatpush1.msra.mxu0 %v1714
        %1760 = vmatprep.subr.mxu0 %v1720
        %1761 = vmatpush1.msra.mxu0 %v1722
        %1762 = vmatprep.subr.mxu0 %v1728
        %1763 = vmatpush1.msra.mxu0 %v1730
        %1764 = vmatprep.subr.mxu0 %v1736
        %1765 = vmatpush1.msra.mxu0 %v1738
        %1766 = vmatprep.subr.mxu0 %v1744
        %1767 = vmatpush1.msra.mxu0 %v1746
        %1768 = vmatprep.subr.mxu0 0.0
        %1769 = vmatpush1.msra.mxu0 0.0
        %1770 = vmatprep.subr.mxu0 0.0
        %1771 = vmatpush1.msra.mxu0 0.0
        %1772 = vmatprep.subr.mxu0 0.0
        %1773 = vmatpush1.msra.mxu0 0.0
        %1774 = vmatprep.subr.mxu0 0.0
        %1775 = vmatpush1.msra.mxu0 0.0
        %1776 = vmatprep.subr.mxu0 0.0
        %1777 = vmatpush1.msra.mxu0 0.0
        %1778 = vmatprep.subr.mxu0 0.0
        %1779 = vmatpush1.msra.mxu0 0.0
        %1780 = vmatprep.subr.mxu0 0.0
        %1781 = vmatpush1.msra.mxu0 0.0
        %1782 = vmatprep.subr.mxu0 0.0
        %1783 = vmatpush1.msra.mxu0 0.0
        %1784 = vmatprep.subr.mxu0 0.0
        %1785 = vmatpush1.msra.mxu0 0.0
        %1786 = vmatprep.subr.mxu0 0.0
        %1787 = vmatpush1.msra.mxu0 0.0
        %1788 = vmatprep.subr.mxu0 0.0
        %1789 = vmatpush1.msra.mxu0 0.0
        %1790 = vmatprep.subr.mxu0 0.0
        %1791 = vmatpush1.msra.mxu0 0.0
        %1792 = vmatprep.subr.mxu0 0.0
        %1793 = vmatpush1.msra.mxu0 0.0
        %1794 = vmatprep.subr.mxu0 0.0
        %1795 = vmatpush1.msra.mxu0 0.0
        %1796 = vmatprep.subr.mxu0 0.0
        %1797 = vmatpush1.msra.mxu0 0.0
        %1798 = vmatprep.subr.mxu0 0.0
        %1799 = vmatpush1.msra.mxu0 0.0
        %1800 = vmatprep.subr.mxu0 0.0
        %1801 = vmatpush1.msra.mxu0 0.0
        %1802 = vmatprep.subr.mxu0 0.0
        %1803 = vmatpush1.msra.mxu0 0.0
        %1804 = vmatprep.subr.mxu0 0.0
        %1805 = vmatpush1.msra.mxu0 0.0
        %1806 = vmatprep.subr.mxu0 0.0
        %1807 = vmatpush1.msra.mxu0 0.0
        %1808 = vmatprep.subr.mxu0 0.0
        %1809 = vmatpush1.msra.mxu0 0.0
        %1810 = vmatprep.subr.mxu0 0.0
        %1811 = vmatpush1.msra.mxu0 0.0
        %1812 = vmatprep.subr.mxu0 0.0
        %1813 = vmatpush1.msra.mxu0 0.0
        %1814 = vmatprep.subr.mxu0 0.0
        %1815 = vmatpush1.msra.mxu0 0.0
        %1816 = vmatprep.subr.mxu0 0.0
        %1817 = vmatpush1.msra.mxu0 0.0
        %1818 = vmatprep.mubr.f32.mxu0 0.0
        %1819 = vmatmul.mubr.f32.gmra.mrb[0].mxu0 %v1752
        %v1820 = vpop.f32.mrb[0].mxu0
        %v1821 = vadd.f32 0.0, %v1820
        %v1822 = vpop.f32.mrb[0].mxu0
        %v1823 = vadd.f32 0.0, %v1822
        %1824 = vdwg.mxu0
        %v1825 = vld [vmem:[%s6] sm:$0xf]
        %1827 = vset.pattern.permute.xlu0 0
        %1828 = vperm.xlu0 %1827, %v1825
        %v1829 = vpop.permute.xlu0 %1828
        %v1831 = vmul.f32 %v1821, %v1829
        %v1832 = vmul.f32 %v1823, %v1829
        %v1833 = vld [vmem:[%s7] sm:$0xf]
        %1835 = vset.pattern.permute.xlu0 0
        %1836 = vperm.xlu0 %1835, %v1833
        %v1837 = vpop.permute.xlu0 %1836
        %v1839 = vadd.f32 %v1831, %v1837
        %v1840 = vadd.f32 %v1832, %v1837
        %v1841 = vmax.f32 %v1839, 0.0
        %v1842 = vmax.f32 %v1840, 0.0
        %1844 = vrot.lane.b32.xlu0 %v1841, 3
        %v1845 = vpop.permute.xlu0 %1844
        %1847 = vst.msk [vmem:[#allocation3] sm:$0xf] %vm1064, %v1845
        %1849 = vrot.lane.b32.xlu0 %v1842, 3
        %v1850 = vpop.permute.xlu0 %1849
        %1852 = vst.msk [vmem:[#allocation3 + $0x8] sm:$0xf] %vm1064, %v1850
        %v1853 = vld [vmem:[#allocation3] sm:$0xff]
        %v1854 = vld [vmem:[#allocation3 + $0x8] sm:$0xff]
        %1857 = vrot.lane.b32.xlu0 %v1853, 127
        %v1858 = vpop.permute.xlu0 %1857
        %1859 = vrot.lane.b32.xlu0 %v1854, 127
        %v1860 = vpop.permute.xlu0 %1859
        %v1861 = vsel %vm1705, %v1858, %v1860
        %1864 = vrot.lane.b32.xlu0 %v1853, 126
        %v1865 = vpop.permute.xlu0 %1864
        %1866 = vrot.lane.b32.xlu0 %v1854, 126
        %v1867 = vpop.permute.xlu0 %1866
        %v1868 = vsel %vm1713, %v1865, %v1867
        %1871 = vrot.lane.b32.xlu0 %v1853, 125
        %v1872 = vpop.permute.xlu0 %1871
        %1873 = vrot.lane.b32.xlu0 %v1854, 125
        %v1874 = vpop.permute.xlu0 %1873
        %v1875 = vsel %vm1721, %v1872, %v1874
        %1878 = vrot.lane.b32.xlu0 %v1853, 124
        %v1879 = vpop.permute.xlu0 %1878
        %1880 = vrot.lane.b32.xlu0 %v1854, 124
        %v1881 = vpop.permute.xlu0 %1880
        %v1882 = vsel %vm1729, %v1879, %v1881
        %1885 = vrot.lane.b32.xlu0 %v1853, 123
        %v1886 = vpop.permute.xlu0 %1885
        %1887 = vrot.lane.b32.xlu0 %v1854, 123
        %v1888 = vpop.permute.xlu0 %1887
        %v1889 = vsel %vm1737, %v1886, %v1888
        %1892 = vrot.lane.b32.xlu0 %v1853, 122
        %v1893 = vpop.permute.xlu0 %1892
        %1894 = vrot.lane.b32.xlu0 %v1854, 122
        %v1895 = vpop.permute.xlu0 %1894
        %v1896 = vsel %vm1745, %v1893, %v1895
        %v1899 = vld [vmem:[%s8] sm:$0xf]
        %v1901 = vsel %vm1750, %v1899, 0
        %1903 = vmatprep.subr.mxu0 %v1854
        %1904 = vmatpush1.msra.mxu0 %v1853
        %1905 = vmatprep.subr.mxu0 %v1860
        %1906 = vmatpush1.msra.mxu0 %v1861
        %1907 = vmatprep.subr.mxu0 %v1867
        %1908 = vmatpush1.msra.mxu0 %v1868
        %1909 = vmatprep.subr.mxu0 %v1874
        %1910 = vmatpush1.msra.mxu0 %v1875
        %1911 = vmatprep.subr.mxu0 %v1881
        %1912 = vmatpush1.msra.mxu0 %v1882
        %1913 = vmatprep.subr.mxu0 %v1888
        %1914 = vmatpush1.msra.mxu0 %v1889
        %1915 = vmatprep.subr.mxu0 %v1895
        %1916 = vmatpush1.msra.mxu0 %v1896
        %1917 = vmatprep.subr.mxu0 0.0
        %1918 = vmatpush1.msra.mxu0 0.0
        %1919 = vmatprep.subr.mxu0 0.0
        %1920 = vmatpush1.msra.mxu0 0.0
        %1921 = vmatprep.subr.mxu0 0.0
        %1922 = vmatpush1.msra.mxu0 0.0
        %1923 = vmatprep.subr.mxu0 0.0
        %1924 = vmatpush1.msra.mxu0 0.0
        %1925 = vmatprep.subr.mxu0 0.0
        %1926 = vmatpush1.msra.mxu0 0.0
        %1927 = vmatprep.subr.mxu0 0.0
        %1928 = vmatpush1.msra.mxu0 0.0
        %1929 = vmatprep.subr.mxu0 0.0
        %1930 = vmatpush1.msra.mxu0 0.0
        %1931 = vmatprep.subr.mxu0 0.0
        %1932 = vmatpush1.msra.mxu0 0.0
        %1933 = vmatprep.subr.mxu0 0.0
        %1934 = vmatpush1.msra.mxu0 0.0
        %1935 = vmatprep.subr.mxu0 0.0
        %1936 = vmatpush1.msra.mxu0 0.0
        %1937 = vmatprep.subr.mxu0 0.0
        %1938 = vmatpush1.msra.mxu0 0.0
        %1939 = vmatprep.subr.mxu0 0.0
        %1940 = vmatpush1.msra.mxu0 0.0
        %1941 = vmatprep.subr.mxu0 0.0
        %1942 = vmatpush1.msra.mxu0 0.0
        %1943 = vmatprep.subr.mxu0 0.0
        %1944 = vmatpush1.msra.mxu0 0.0
        %1945 = vmatprep.subr.mxu0 0.0
        %1946 = vmatpush1.msra.mxu0 0.0
        %1947 = vmatprep.subr.mxu0 0.0
        %1948 = vmatpush1.msra.mxu0 0.0
        %1949 = vmatprep.subr.mxu0 0.0
        %1950 = vmatpush1.msra.mxu0 0.0
        %1951 = vmatprep.subr.mxu0 0.0
        %1952 = vmatpush1.msra.mxu0 0.0
        %1953 = vmatprep.subr.mxu0 0.0
        %1954 = vmatpush1.msra.mxu0 0.0
        %1955 = vmatprep.subr.mxu0 0.0
        %1956 = vmatpush1.msra.mxu0 0.0
        %1957 = vmatprep.subr.mxu0 0.0
        %1958 = vmatpush1.msra.mxu0 0.0
        %1959 = vmatprep.subr.mxu0 0.0
        %1960 = vmatpush1.msra.mxu0 0.0
        %1961 = vmatprep.subr.mxu0 0.0
        %1962 = vmatpush1.msra.mxu0 0.0
        %1963 = vmatprep.subr.mxu0 0.0
        %1964 = vmatpush1.msra.mxu0 0.0
        %1965 = vmatprep.subr.mxu0 0.0
        %1966 = vmatpush1.msra.mxu0 0.0
        %1967 = vmatprep.mubr.f32.mxu0 0.0
        %1968 = vmatmul.mubr.f32.gmra.mrb[0].mxu0 %v1901
        %v1969 = vpop.f32.mrb[0].mxu0
        %v1970 = vadd.f32 0.0, %v1969
        %v1971 = vpop.f32.mrb[0].mxu0
        %v1972 = vadd.f32 0.0, %v1971
        %1973 = vdwg.mxu0
        %v1974 = vld [vmem:[%s9] sm:$0xf]
        %1976 = vset.pattern.permute.xlu0 0
        %1977 = vperm.xlu0 %1976, %v1974
        %v1978 = vpop.permute.xlu0 %1977
        %v1980 = vmul.f32 %v1970, %v1978
        %v1981 = vmul.f32 %v1972, %v1978
        %v1982 = vld [vmem:[%s10] sm:$0xf]
        %1984 = vset.pattern.permute.xlu0 0
        %1985 = vperm.xlu0 %1984, %v1982
        %v1986 = vpop.permute.xlu0 %1985
        %v1988 = vadd.f32 %v1980, %v1986
        %v1989 = vadd.f32 %v1981, %v1986
        %v1990 = vmax.f32 %v1988, 0.0
        %v1991 = vmax.f32 %v1989, 0.0
        %vm1992 = vcmask 551936
        %1993 = vst.msk [vmem:[%s431] sm:$0xf] %vm1992, %v1990
        %1995 = vrot.lane.b32.xlu0 %v1991, 68
        %v1996 = vpop.permute.xlu0 %1995
        %v1997 = vrot.slane %v1996, 4
        %vm1998 = vcmask 556032
        %v1999 = vsel %vm1998, %v1997, %v1996
        %vm2001 = vcmask 1044000
        %vm2002 = vcmask 64516
        %vm2003 = vmor %vm2002, %vm2001
        %2004 = vst.msk [vmem:[%s431] sm:$0xff] %vm2003, %v1999
        %s2005 = sand.u32 %s278, 1
        %s2006 = scalar_lea.sflag [#allocation6], %s2005
        %s2007 = sand.u32 %s278, 1
        %s2008 = smul.addr %s2007, 8
        %s2009 = scalar_lea.vmem [#allocation9], %s2008
        // Predicated region
        $region73: #{tpu_custom_call.1} parent=63 // pred_check
          %p2010 = pneg %p288
        $region74: #{tpu_custom_call.1} parent=63 // pred_check_branch
          %2012 = sbr.rel (%p2010) target = $region76
        $region75: #{tpu_custom_call.1} parent=63 // pred_region
          %s2014 = ssub.s32 128, 128
          %2015 = vsyncadd %s2006, %s2014
          %s2016 = smul.addr %s29, 2
          %s2017 = smul.addr %s2016, 64
          %s2018 = scalar_lea.hbm %s11, %s2017
          %s2020 = sshll.u32 %s2009, 4
          %s2021 = int_to_ptr.vmem [resolvable:$true] %s2020
          %2023 = dma.vmem_to_hbm [thread:$0]  %s2021, 128, %s2018, %s2006
        $region76: #{tpu_custom_call.1} parent=63 // pred_fallthru
          _
      $region64: #{tpu_custom_call.1} parent=5 // pred_fallthru
        _
      %p2024 = scmp.le.s32.totalorder 2, %s24
      // Predicated region
      $region77: #{tpu_custom_call.1} parent=5 // pred_check
        %p2025 = pneg %p2024
      $region78: #{tpu_custom_call.1} parent=5 // pred_check_branch
        %2027 = sbr.rel (%p2025) target = $region80
      $region79: #{tpu_custom_call.1} parent=5 // pred_region
        %s2028 = ssub.s32 %s24, 2
        // Predicated region
        $region81: #{tpu_custom_call.1} parent=79 // pred_check
          %p2029 = pneg %p294
        $region82: #{tpu_custom_call.1} parent=79 // pred_check_branch
          %2031 = sbr.rel (%p2029) target = $region84
        $region83: #{tpu_custom_call.1} parent=79 // pred_region
          %s2032 = sand.u32 %s279, 1
          %s2033 = scalar_lea.sflag [#allocation6], %s2032
          %s2034 = sand.u32 %s279, 1
          %s2035 = smul.addr %s2034, 8
          %s2036 = scalar_lea.vmem [#allocation9], %s2035
          %2037 = dma.done %s2033, 128
        $region84: #{tpu_custom_call.1} parent=79 // pred_fallthru
          _
      $region80: #{tpu_custom_call.1} parent=5 // pred_fallthru
        _
    $region6: #{tpu_custom_call.1} parent=1 // loop_footer
      %s28 = sadd.s32 1, %s24
    $region7: #{tpu_custom_call.1} parent=1 // loop_footer_branch
      %23 = sbr.rel target = $region3
    $region8: #{tpu_custom_call.1} parent=1 // loop_exit
      _
    %2038 = vsyncpa [#allocation5], 1
    %s2039 = scalar_lea.sflag [#allocation5], 1
    %2040 = vsyncpa %s2039, 1
    %2041 = vsyncpa [#allocation8], 1
    %2042 = vsyncpa [#allocation6], 1
    %s2043 = scalar_lea.sflag [#allocation6], 1
    %2044 = vsyncpa %s2043, 1

</llo_original>
